<compile_context>
chip_gen: v7x
topology: tpu7x:2x2x1
jax: 0.10.0
libtpu: 0.0.40
codegen_flags: <defaults>
</compile_context>

<pallas_src>
import functools
import math

import jax
import jax.numpy as jnp
from jax import lax
from jax.experimental import pallas as pl
from jax.experimental.pallas import tpu as pltpu

_BN_EPS = 1e-5
_LANE = 128
_SUBLANE = 8


def _round_up(n, m):
    return ((n + m - 1) // m) * m


# ---------------------------------------------------------------------------
# Kernel
# ---------------------------------------------------------------------------
def _l3lr_kernel(bn_mode, b_actual, tb,
                 x_ref,
                 w1, b1, w2, b2, w3, b3, w4, b4,
                 g1, be1, g2, be2, g3, be3,
                 o_ref, stats_ref):
    w_refs = (w1, w2, w3, w4)
    b_refs = (b1, b2, b3, b4)
    g_refs = (g1, g2, g3)
    be_refs = (be1, be2, be3)

    x = x_ref[...].astype(jnp.bfloat16)          # (tb, in_pad) bf16 for the MXU

    def linear(h_bf16, layer):
        # bf16 x bf16 -> f32 accumulation on the MXU, f32 bias add.
        return (jnp.dot(h_bf16, w_refs[layer][...],
                        preferred_element_type=jnp.float32)
                + b_refs[layer][...])

    def relu(h):
        return jnp.maximum(h, 0.0)

    def bf16(h):
        return h.astype(jnp.bfloat16)

    # ----------------------- plain MLP (no BatchNorm) -----------------------
    if bn_mode is None:
        h = bf16(relu(linear(x, 0)))
        h = bf16(relu(linear(h, 1)))
        h = bf16(relu(linear(h, 2)))
        o_ref[...] = linear(h, 3).astype(o_ref.dtype)
        return

    # ------------------- BN modes: grid = (4 passes, tiles) -----------------
    p = pl.program_id(0)
    i = pl.program_id(1)
    n_tiles = pl.num_programs(1)
    h_pad = stats_ref.shape[-1]

    def bn_apply(h_f32, layer):
        # stats_ref rows 2*layer / 2*layer+1 hold finalized mean / inv_std.
        mean = stats_ref[2 * layer:2 * layer + 1, :]
        inv = stats_ref[2 * layer + 1:2 * layer + 2, :]
        return (h_f32 - mean) * inv * g_refs[layer][...] + be_refs[layer][...]

    def bn_input(layer):
        """f32 (tb, h_pad) activation whose batch statistics feed BN `layer`."""
        if bn_mode == 'pre':
            h = linear(x, 0)
            for q in range(layer):
                h = linear(bf16(relu(bn_apply(h, q))), q + 1)
            return h
        else:  # 'post'
            a = relu(linear(x, 0))
            for q in range(layer):
                a = relu(linear(bf16(bn_apply(a, q)), q + 1))
            return a

    def final_out():
        if bn_mode == 'pre':
            return linear(bf16(relu(bn_apply(bn_input(2), 2))), 3)
        else:  # 'post'
            return linear(bf16(bn_apply(bn_input(2), 2)), 3)

    # Rows of this batch tile that are real (not batch padding).
    row = i * tb + lax.broadcasted_iota(jnp.int32, (tb, 1), 0)
    valid = row < b_actual

    # Passes 0..2: accumulate per-feature sum / sum-of-squares for BN `layer`.
    for layer in range(3):
        @pl.when(p == layer)
        def _(layer=layer):
            h = bn_input(layer)
            hm = jnp.where(valid, h, 0.0)
            s = jnp.sum(hm, axis=0, keepdims=True)
            ss = jnp.sum(hm * hm, axis=0, keepdims=True)
            r = 2 * layer

            @pl.when(i == 0)
            def _():
                stats_ref[r:r + 1, :] = s
                stats_ref[r + 1:r + 2, :] = ss

            @pl.when(i > 0)
            def _():
                stats_ref[r:r + 1, :] += s
                stats_ref[r + 1:r + 2, :] += ss

            # Finalize (sum, sumsq) -> (mean, inv_std) in place on last tile.
            @pl.when(i == n_tiles - 1)
            def _():
                inv_b = 1.0 / float(b_actual)
                mean = stats_ref[r:r + 1, :] * inv_b
                msq = stats_ref[r + 1:r + 2, :] * inv_b
                var = jnp.maximum(msq - mean * mean, 0.0)
                stats_ref[r:r + 1, :] = mean
                stats_ref[r + 1:r + 2, :] = lax.rsqrt(var + _BN_EPS)

    # Pass 3: all BN stats finalized -> compute and write the output tile.
    @pl.when(p == 3)
    def _():
        o_ref[...] = final_out().astype(o_ref.dtype)


# ---------------------------------------------------------------------------
# Parameter preparation (one-time): pad to lanes, transpose, cast to bf16
# ---------------------------------------------------------------------------
def prepare_params(raw, in_features, hidden_dim, out_features):
    in_pad = _round_up(in_features, _LANE)
    h_pad = _round_up(hidden_dim, _LANE)
    out_pad = _round_up(out_features, _LANE)
    dims = [(in_features, in_pad, hidden_dim, h_pad),
            (hidden_dim, h_pad, hidden_dim, h_pad),
            (hidden_dim, h_pad, hidden_dim, h_pad),
            (hidden_dim, h_pad, out_features, out_pad)]
    prep = {'in_features': in_features, 'out_features': out_features,
            'in_pad': in_pad, 'h_pad': h_pad, 'out_pad': out_pad}
    for idx, (fi, fip, fo, fop) in enumerate(dims, start=1):
        wt = jnp.zeros((fip, fop), jnp.bfloat16).at[:fi, :fo].set(
            jnp.transpose(raw[f'w{idx}']).astype(jnp.bfloat16))
        b = jnp.zeros((1, fop), jnp.float32).at[0, :fo].set(raw[f'b{idx}'])
        prep[f'w{idx}'] = wt
        prep[f'b{idx}'] = b
    for idx in (1, 2, 3):
        prep[f'g{idx}'] = jnp.zeros((1, h_pad), jnp.float32).at[
            0, :hidden_dim].set(raw[f'g{idx}'])
        prep[f'be{idx}'] = jnp.zeros((1, h_pad), jnp.float32).at[
            0, :hidden_dim].set(raw[f'be{idx}'])
    return prep


# ---------------------------------------------------------------------------
# Forward wrapper
# ---------------------------------------------------------------------------
def l3lr_with_bn_forward(x, prep, bn_mode=None, tile_b=128):
    B, in_f = x.shape
    assert in_f == prep['in_features']
    in_pad, h_pad, out_pad = prep['in_pad'], prep['h_pad'], prep['out_pad']
    out_f = prep['out_features']

    # Batch tile: multiple of 8 sublanes, at most tile_b.
    tb = min(tile_b, _round_up(B, _SUBLANE))
    tb = max(_SUBLANE, (tb // _SUBLANE) * _SUBLANE)
    b_pad = _round_up(B, tb)
    n_tiles = b_pad // tb

    # Zero-pad the input once in the wrapper; padded rows are masked out of BN
    # statistics inside the kernel and sliced off the output below.
    xp = jnp.zeros((b_pad, in_pad), jnp.float32).at[:B, :in_f].set(
        x.astype(jnp.float32))

    param_names = ('w1', 'b1', 'w2', 'b2', 'w3', 'b3', 'w4', 'b4',
                   'g1', 'be1', 'g2', 'be2', 'g3', 'be3')
    params = [prep[k] for k in param_names]

    if bn_mode is None:
        grid = (n_tiles,)
        x_spec = pl.BlockSpec((tb, in_pad), lambda i: (i, 0))
        o_spec = pl.BlockSpec((tb, out_pad), lambda i: (i, 0))

        def pspec(shape):
            return pl.BlockSpec(shape, lambda i: (0,) * len(shape))
        dim_sem = ("parallel",)                     # megacore batch sharding
    else:
        grid = (4, n_tiles)                         # (pass, batch-tile), pass outermost
        x_spec = pl.BlockSpec((tb, in_pad), lambda p, i: (i, 0))
        o_spec = pl.BlockSpec((tb, out_pad), lambda p, i: (i, 0))

        def pspec(shape):
            return pl.BlockSpec(shape, lambda p, i: (0,) * len(shape))
        dim_sem = ("arbitrary", "arbitrary")        # shared stats accumulator

    # Explicit VMEM budget: resident weights/params + double-buffered x/out
    # tiles + stats scratch + headroom for live activations / temporaries.
    weight_bytes = sum(int(prep[f'w{k}'].size) * 2 for k in (1, 2, 3, 4))
    vec_bytes = sum(int(prep[n].size) * 4 for n in param_names if not n.startswith('w'))
    io_bytes = 4 * (tb * in_pad + tb * out_pad)
    scratch_bytes = 4 * 8 * h_pad
    est = 2 * (weight_bytes + vec_bytes + io_bytes) + scratch_bytes
    vmem_limit = int(min(48 * 1024 * 1024,
                         max(est + 8 * 1024 * 1024, 16 * 1024 * 1024)))

    kernel = functools.partial(_l3lr_kernel, bn_mode, B, tb)

    out = pl.pallas_call(
        kernel,
        out_shape=jax.ShapeDtypeStruct((b_pad, out_pad), jnp.float32),
        grid_spec=pltpu.PrefetchScalarGridSpec(
            num_scalar_prefetch=0,
            grid=grid,
            in_specs=[x_spec] + [pspec(a.shape) for a in params],
            out_specs=o_spec,
            scratch_shapes=[pltpu.VMEM((8, h_pad), jnp.float32)],  # BN sum/sumsq -> mean/inv_std
        ),
        compiler_params=pltpu.CompilerParams(
            dimension_semantics=dim_sem,
            vmem_limit_bytes=vmem_limit),
    )(xp, *params)

    return out[:B, :out_f]


# ---------------------------------------------------------------------------
# Params (PyTorch-style layout/init) and a pure-JAX reference mirroring the
# kernel's numerics (bf16 matmul inputs, f32 accumulation, f32 BN).
# ---------------------------------------------------------------------------
def init_params(key, in_features, hidden_dim, out_features):
    dims = [(hidden_dim, in_features),
            (hidden_dim, hidden_dim),
            (hidden_dim, hidden_dim),
            (out_features, hidden_dim)]
    params = {}
    for i, (fo, fi) in enumerate(dims, start=1):
        key, kw, kb = jax.random.split(key, 3)
        bound = 1.0 / math.sqrt(fi)
        params[f'w{i}'] = jax.random.uniform(kw, (fo, fi), jnp.float32, -bound, bound)
        params[f'b{i}'] = jax.random.uniform(kb, (fo,), jnp.float32, -bound, bound)
    for i in (1, 2, 3):
        params[f'g{i}'] = jnp.ones((hidden_dim,), jnp.float32)
        params[f'be{i}'] = jnp.zeros((hidden_dim,), jnp.float32)
    return params


def reference_forward(x, raw, bn_mode):
    bf = lambda a: a.astype(jnp.bfloat16)

    def lin(h, w, b):
        return jnp.dot(bf(h), bf(w).T, preferred_element_type=jnp.float32) + b

    def bn(h, g, be):
        mean = jnp.mean(h, axis=0, keepdims=True)
        var = jnp.maximum(jnp.mean(h * h, axis=0, keepdims=True) - mean * mean, 0.0)
        return (h - mean) * lax.rsqrt(var + _BN_EPS) * g[None, :] + be[None, :]

    relu = lambda h: jnp.maximum(h, 0.0)
    if bn_mode == 'pre':
        out = relu(bn(lin(x, raw['w1'], raw['b1']), raw['g1'], raw['be1']))
        out = relu(bn(lin(out, raw['w2'], raw['b2']), raw['g2'], raw['be2']))
        out = relu(bn(lin(out, raw['w3'], raw['b3']), raw['g3'], raw['be3']))
        out = lin(out, raw['w4'], raw['b4'])
    elif bn_mode == 'post':
        out = relu(lin(x, raw['w1'], raw['b1']))
        out = relu(lin(bn(out, raw['g1'], raw['be1']), raw['w2'], raw['b2']))
        out = relu(lin(bn(out, raw['g2'], raw['be2']), raw['w3'], raw['b3']))
        out = lin(bn(out, raw['g3'], raw['be3']), raw['w4'], raw['b4'])
    else:
        out = relu(lin(x, raw['w1'], raw['b1']))
        out = relu(lin(out, raw['w2'], raw['b2']))
        out = relu(lin(out, raw['w3'], raw['b3']))
        out = lin(out, raw['w4'], raw['b4'])
    return out


if __name__ == "__main__":
    in_features, hidden_dim, out_features = 2, 4, 1
    batch = 250   # not a multiple of the tile -> exercises batch padding/masking

    key = jax.random.PRNGKey(0)
    key, kx = jax.random.split(key)
    raw = init_params(key, in_features, hidden_dim, out_features)
    prep = prepare_params(raw, in_features, hidden_dim, out_features)
    x = jax.random.normal(kx, (batch, in_features), jnp.float32)

    for mode in (None, 'pre', 'post'):
        y = l3lr_with_bn_forward(x, prep, bn_mode=mode, tile_b=128)
        jax.block_until_ready(y)
        assert y.shape == (batch, out_features)
        y_ref = reference_forward(x, raw, mode)
        assert bool(jnp.allclose(y, y_ref, rtol=2e-2, atol=2e-2)), mode

    print("KERNEL_OK")
</pallas_src>

<mosaic_0001>
module attributes {stable_mosaic.version = 11 : i64} {
  func.func @_l3lr_kernel(%arg0: i32, %arg1: memref<128x128xf32, #tpu.memory_space<vmem>>, %arg2: memref<128x128xbf16, #tpu.memory_space<vmem>>, %arg3: memref<1x128xf32, #tpu.memory_space<vmem>>, %arg4: memref<128x128xbf16, #tpu.memory_space<vmem>>, %arg5: memref<1x128xf32, #tpu.memory_space<vmem>>, %arg6: memref<128x128xbf16, #tpu.memory_space<vmem>>, %arg7: memref<1x128xf32, #tpu.memory_space<vmem>>, %arg8: memref<128x128xbf16, #tpu.memory_space<vmem>>, %arg9: memref<1x128xf32, #tpu.memory_space<vmem>>, %arg10: memref<1x128xf32, #tpu.memory_space<vmem>>, %arg11: memref<1x128xf32, #tpu.memory_space<vmem>>, %arg12: memref<1x128xf32, #tpu.memory_space<vmem>>, %arg13: memref<1x128xf32, #tpu.memory_space<vmem>>, %arg14: memref<1x128xf32, #tpu.memory_space<vmem>>, %arg15: memref<1x128xf32, #tpu.memory_space<vmem>>, %arg16: memref<128x128xf32, #tpu.memory_space<vmem>>, %arg17: memref<8x128xf32, #tpu.memory_space<vmem>>) attributes {dimension_semantics = [#tpu.dimension_semantics<parallel>], iteration_bounds = array<i64: 2>, scalar_prefetch = 0 : i64, scratch_operands = 1 : i64, tpu.core_type = #tpu.core_type<tc>, window_params = [{transform_indices = @transform_0, window_bounds = array<i64: 128, 128>}, {pipeline_mode = #tpu.pipeline_mode<synchronous>, transform_indices = @transform_1, window_bounds = array<i64: 128, 128>}, {pipeline_mode = #tpu.pipeline_mode<synchronous>, transform_indices = @transform_2, window_bounds = array<i64: 1, 128>}, {pipeline_mode = #tpu.pipeline_mode<synchronous>, transform_indices = @transform_3, window_bounds = array<i64: 128, 128>}, {pipeline_mode = #tpu.pipeline_mode<synchronous>, transform_indices = @transform_4, window_bounds = array<i64: 1, 128>}, {pipeline_mode = #tpu.pipeline_mode<synchronous>, transform_indices = @transform_5, window_bounds = array<i64: 128, 128>}, {pipeline_mode = #tpu.pipeline_mode<synchronous>, transform_indices = @transform_6, window_bounds = array<i64: 1, 128>}, {pipeline_mode = #tpu.pipeline_mode<synchronous>, transform_indices = @transform_7, window_bounds = array<i64: 128, 128>}, {pipeline_mode = #tpu.pipeline_mode<synchronous>, transform_indices = @transform_8, window_bounds = array<i64: 1, 128>}, {pipeline_mode = #tpu.pipeline_mode<synchronous>, transform_indices = @transform_9, window_bounds = array<i64: 1, 128>}, {pipeline_mode = #tpu.pipeline_mode<synchronous>, transform_indices = @transform_10, window_bounds = array<i64: 1, 128>}, {pipeline_mode = #tpu.pipeline_mode<synchronous>, transform_indices = @transform_11, window_bounds = array<i64: 1, 128>}, {pipeline_mode = #tpu.pipeline_mode<synchronous>, transform_indices = @transform_12, window_bounds = array<i64: 1, 128>}, {pipeline_mode = #tpu.pipeline_mode<synchronous>, transform_indices = @transform_13, window_bounds = array<i64: 1, 128>}, {pipeline_mode = #tpu.pipeline_mode<synchronous>, transform_indices = @transform_14, window_bounds = array<i64: 1, 128>}, {transform_indices = @transform_15, window_bounds = array<i64: 128, 128>}]} {
    %c0 = arith.constant 0 : index
    %c0_0 = arith.constant 0 : index
    %0 = vector.load %arg1[%c0, %c0_0] : memref<128x128xf32, #tpu.memory_space<vmem>>, vector<128x128xf32>
    %1 = arith.truncf %0 : vector<128x128xf32> to vector<128x128xbf16>
    %c0_1 = arith.constant 0 : index
    %c0_2 = arith.constant 0 : index
    %2 = vector.load %arg2[%c0_1, %c0_2] : memref<128x128xbf16, #tpu.memory_space<vmem>>, vector<128x128xbf16>
    %cst = arith.constant dense<0.000000e+00> : vector<128x128xf32>
    %3 = tpu.matmul %1, %2, %cst {dimension_numbers = #tpu.dot_dimension_numbers<[1], [0], [0], [1], [0, 0, 1, 1], [], []>} : vector<128x128xbf16>, vector<128x128xbf16>, vector<128x128xf32> -> vector<128x128xf32>
    %c0_3 = arith.constant 0 : index
    %c0_4 = arith.constant 0 : index
    %4 = vector.load %arg3[%c0_3, %c0_4] : memref<1x128xf32, #tpu.memory_space<vmem>>, vector<1x128xf32>
    %5 = vector.broadcast %4 : vector<1x128xf32> to vector<128x128xf32>
    %6 = arith.addf %3, %5 : vector<128x128xf32>
    %cst_5 = arith.constant 0.000000e+00 : f32
    %7 = vector.broadcast %cst_5 : f32 to vector<128x128xf32>
    %8 = arith.maximumf %6, %7 : vector<128x128xf32>
    %9 = arith.truncf %8 : vector<128x128xf32> to vector<128x128xbf16>
    %c0_6 = arith.constant 0 : index
    %c0_7 = arith.constant 0 : index
    %10 = vector.load %arg4[%c0_6, %c0_7] : memref<128x128xbf16, #tpu.memory_space<vmem>>, vector<128x128xbf16>
    %cst_8 = arith.constant dense<0.000000e+00> : vector<128x128xf32>
    %11 = tpu.matmul %9, %10, %cst_8 {dimension_numbers = #tpu.dot_dimension_numbers<[1], [0], [0], [1], [0, 0, 1, 1], [], []>} : vector<128x128xbf16>, vector<128x128xbf16>, vector<128x128xf32> -> vector<128x128xf32>
    %c0_9 = arith.constant 0 : index
    %c0_10 = arith.constant 0 : index
    %12 = vector.load %arg5[%c0_9, %c0_10] : memref<1x128xf32, #tpu.memory_space<vmem>>, vector<1x128xf32>
    %13 = vector.broadcast %12 : vector<1x128xf32> to vector<128x128xf32>
    %14 = arith.addf %11, %13 : vector<128x128xf32>
    %cst_11 = arith.constant 0.000000e+00 : f32
    %15 = vector.broadcast %cst_11 : f32 to vector<128x128xf32>
    %16 = arith.maximumf %14, %15 : vector<128x128xf32>
    %17 = arith.truncf %16 : vector<128x128xf32> to vector<128x128xbf16>
    %c0_12 = arith.constant 0 : index
    %c0_13 = arith.constant 0 : index
    %18 = vector.load %arg6[%c0_12, %c0_13] : memref<128x128xbf16, #tpu.memory_space<vmem>>, vector<128x128xbf16>
    %cst_14 = arith.constant dense<0.000000e+00> : vector<128x128xf32>
    %19 = tpu.matmul %17, %18, %cst_14 {dimension_numbers = #tpu.dot_dimension_numbers<[1], [0], [0], [1], [0, 0, 1, 1], [], []>} : vector<128x128xbf16>, vector<128x128xbf16>, vector<128x128xf32> -> vector<128x128xf32>
    %c0_15 = arith.constant 0 : index
    %c0_16 = arith.constant 0 : index
    %20 = vector.load %arg7[%c0_15, %c0_16] : memref<1x128xf32, #tpu.memory_space<vmem>>, vector<1x128xf32>
    %21 = vector.broadcast %20 : vector<1x128xf32> to vector<128x128xf32>
    %22 = arith.addf %19, %21 : vector<128x128xf32>
    %cst_17 = arith.constant 0.000000e+00 : f32
    %23 = vector.broadcast %cst_17 : f32 to vector<128x128xf32>
    %24 = arith.maximumf %22, %23 : vector<128x128xf32>
    %25 = arith.truncf %24 : vector<128x128xf32> to vector<128x128xbf16>
    %c0_18 = arith.constant 0 : index
    %c0_19 = arith.constant 0 : index
    %26 = vector.load %arg8[%c0_18, %c0_19] : memref<128x128xbf16, #tpu.memory_space<vmem>>, vector<128x128xbf16>
    %cst_20 = arith.constant dense<0.000000e+00> : vector<128x128xf32>
    %27 = tpu.matmul %25, %26, %cst_20 {dimension_numbers = #tpu.dot_dimension_numbers<[1], [0], [0], [1], [0, 0, 1, 1], [], []>} : vector<128x128xbf16>, vector<128x128xbf16>, vector<128x128xf32> -> vector<128x128xf32>
    %c0_21 = arith.constant 0 : index
    %c0_22 = arith.constant 0 : index
    %28 = vector.load %arg9[%c0_21, %c0_22] : memref<1x128xf32, #tpu.memory_space<vmem>>, vector<1x128xf32>
    %29 = vector.broadcast %28 : vector<1x128xf32> to vector<128x128xf32>
    %30 = arith.addf %27, %29 : vector<128x128xf32>
    %c0_23 = arith.constant 0 : index
    %c0_24 = arith.constant 0 : index
    %31 = vector.load %arg16[%c0_23, %c0_24] : memref<128x128xf32, #tpu.memory_space<vmem>>, vector<128x128xf32>
    tpu.vector_store %arg16[%c0_23, %c0_24], %30 {strides = array<i32>} : memref<128x128xf32, #tpu.memory_space<vmem>>, vector<128x128xf32>,
    return
  }
  func.func @transform_0(%arg0: i32) -> (i32, i32) {
    %c0_i32 = arith.constant 0 : i32
    %c0_i32_0 = arith.constant 0 : i32
    return %arg0, %c0_i32 : i32, i32
  }
  func.func @transform_1(%arg0: i32) -> (i32, i32) {
    %c0_i32 = arith.constant 0 : i32
    %c0_i32_0 = arith.constant 0 : i32
    %c0_i32_1 = arith.constant 0 : i32
    return %c0_i32, %c0_i32_0 : i32, i32
  }
  func.func @transform_2(%arg0: i32) -> (i32, i32) {
    %c0_i32 = arith.constant 0 : i32
    %c0_i32_0 = arith.constant 0 : i32
    %c0_i32_1 = arith.constant 0 : i32
    return %c0_i32, %c0_i32_0 : i32, i32
  }
  func.func @transform_3(%arg0: i32) -> (i32, i32) {
    %c0_i32 = arith.constant 0 : i32
    %c0_i32_0 = arith.constant 0 : i32
    %c0_i32_1 = arith.constant 0 : i32
    return %c0_i32, %c0_i32_0 : i32, i32
  }
  func.func @transform_4(%arg0: i32) -> (i32, i32) {
    %c0_i32 = arith.constant 0 : i32
    %c0_i32_0 = arith.constant 0 : i32
    %c0_i32_1 = arith.constant 0 : i32
    return %c0_i32, %c0_i32_0 : i32, i32
  }
  func.func @transform_5(%arg0: i32) -> (i32, i32) {
    %c0_i32 = arith.constant 0 : i32
    %c0_i32_0 = arith.constant 0 : i32
    %c0_i32_1 = arith.constant 0 : i32
    return %c0_i32, %c0_i32_0 : i32, i32
  }
  func.func @transform_6(%arg0: i32) -> (i32, i32) {
    %c0_i32 = arith.constant 0 : i32
    %c0_i32_0 = arith.constant 0 : i32
    %c0_i32_1 = arith.constant 0 : i32
    return %c0_i32, %c0_i32_0 : i32, i32
  }
  func.func @transform_7(%arg0: i32) -> (i32, i32) {
    %c0_i32 = arith.constant 0 : i32
    %c0_i32_0 = arith.constant 0 : i32
    %c0_i32_1 = arith.constant 0 : i32
    return %c0_i32, %c0_i32_0 : i32, i32
  }
  func.func @transform_8(%arg0: i32) -> (i32, i32) {
    %c0_i32 = arith.constant 0 : i32
    %c0_i32_0 = arith.constant 0 : i32
    %c0_i32_1 = arith.constant 0 : i32
    return %c0_i32, %c0_i32_0 : i32, i32
  }
  func.func @transform_9(%arg0: i32) -> (i32, i32) {
    %c0_i32 = arith.constant 0 : i32
    %c0_i32_0 = arith.constant 0 : i32
    %c0_i32_1 = arith.constant 0 : i32
    return %c0_i32, %c0_i32_0 : i32, i32
  }
  func.func @transform_10(%arg0: i32) -> (i32, i32) {
    %c0_i32 = arith.constant 0 : i32
    %c0_i32_0 = arith.constant 0 : i32
    %c0_i32_1 = arith.constant 0 : i32
    return %c0_i32, %c0_i32_0 : i32, i32
  }
  func.func @transform_11(%arg0: i32) -> (i32, i32) {
    %c0_i32 = arith.constant 0 : i32
    %c0_i32_0 = arith.constant 0 : i32
    %c0_i32_1 = arith.constant 0 : i32
    return %c0_i32, %c0_i32_0 : i32, i32
  }
  func.func @transform_12(%arg0: i32) -> (i32, i32) {
    %c0_i32 = arith.constant 0 : i32
    %c0_i32_0 = arith.constant 0 : i32
    %c0_i32_1 = arith.constant 0 : i32
    return %c0_i32, %c0_i32_0 : i32, i32
  }
  func.func @transform_13(%arg0: i32) -> (i32, i32) {
    %c0_i32 = arith.constant 0 : i32
    %c0_i32_0 = arith.constant 0 : i32
    %c0_i32_1 = arith.constant 0 : i32
    return %c0_i32, %c0_i32_0 : i32, i32
  }
  func.func @transform_14(%arg0: i32) -> (i32, i32) {
    %c0_i32 = arith.constant 0 : i32
    %c0_i32_0 = arith.constant 0 : i32
    %c0_i32_1 = arith.constant 0 : i32
    return %c0_i32, %c0_i32_0 : i32, i32
  }
  func.func @transform_15(%arg0: i32) -> (i32, i32) {
    %c0_i32 = arith.constant 0 : i32
    %c0_i32_0 = arith.constant 0 : i32
    return %arg0, %c0_i32 : i32, i32
  }
}

</mosaic_0001>

<llo_original>
// kernel: tpu_custom_call.1
$region0: #{tpu_custom_call.1}
  #allocation0 [shape = 'u32[]', space=smem, size = 0x4, offset = 0x4, fixed_abs, tag = 'smem constant byte address 0x4 - core index']
  #allocation1 [shape = 'u32[144,128]{1,0:T(1,128)}', space=vmem, size = 0x12000, scoped, tag = 'internal scratch']
  #allocation2 [shape = 'f32[8,128]{1,0:T(8,128)}', space=vmem, size = 0x1000, scoped, tag = 'scratch operand']
  %s0 = inlined_call_operand.hbm [shape: f32[256,128], index: 0, kind: input, shape index: {}]
  %s1 = inlined_call_operand.hbm [shape: bf16[128,128], index: 1, kind: input, shape index: {}]
  %s2 = inlined_call_operand.vmem [shape: f32[1,128], index: 2, kind: input, shape index: {}]
  %s3 = inlined_call_operand.hbm [shape: bf16[128,128], index: 3, kind: input, shape index: {}]
  %s4 = inlined_call_operand.vmem [shape: f32[1,128], index: 4, kind: input, shape index: {}]
  %s5 = inlined_call_operand.hbm [shape: bf16[128,128], index: 5, kind: input, shape index: {}]
  %s6 = inlined_call_operand.vmem [shape: f32[1,128], index: 6, kind: input, shape index: {}]
  %s7 = inlined_call_operand.hbm [shape: bf16[128,128], index: 7, kind: input, shape index: {}]
  %s8 = inlined_call_operand.vmem [shape: f32[1,128], index: 8, kind: input, shape index: {}]
  %s9 = inlined_call_operand.vmem [shape: f32[1,128], index: 9, kind: input, shape index: {}]
  %s10 = inlined_call_operand.vmem [shape: f32[1,128], index: 10, kind: input, shape index: {}]
  %s11 = inlined_call_operand.vmem [shape: f32[1,128], index: 11, kind: input, shape index: {}]
  %s12 = inlined_call_operand.vmem [shape: f32[1,128], index: 12, kind: input, shape index: {}]
  %s13 = inlined_call_operand.vmem [shape: f32[1,128], index: 13, kind: input, shape index: {}]
  %s14 = inlined_call_operand.vmem [shape: f32[1,128], index: 14, kind: input, shape index: {}]
  %s15 = inlined_call_operand.hbm [shape: f32[256,128], index: 15, kind: output, shape index: {}]
  %s16 = sld [smem:[#allocation0]]
  $region113: #{tpu_custom_call.1} parent=0
    _
  %s18 = ssub.s32 1, %s16
  %s19 = scalar_select 0, %s18, %s16
  $region1: #{tpu_custom_call.1} parent=0
    #allocation3 [shape = 'u8[131072]{0}', space=vmem, size = 0x20000, scoped, tag = 'input window, operand 0']
    #allocation4 [shape = 's32[2]{0}', space=sflag, size = 0x8, scoped, tag = 'scoped memory for tpu_custom_call.1']
    #allocation5 [shape = 's32[2]{0}', space=sflag, size = 0x8, scoped, tag = 'scoped memory for tpu_custom_call.1']
    #allocation6 [shape = 'u8[32768]{0}', space=vmem, size = 0x8000, scoped, tag = 'input window, operand 1, single buffered']
    #allocation7 [shape = 's32[1]{0}', space=sflag, size = 0x4, scoped, tag = 'scoped memory for tpu_custom_call.1']
    #allocation8 [shape = 'u8[32768]{0}', space=vmem, size = 0x8000, scoped, tag = 'input window, operand 3, single buffered']
    #allocation9 [shape = 'u8[32768]{0}', space=vmem, size = 0x8000, scoped, tag = 'input window, operand 5, single buffered']
    #allocation10 [shape = 's32[1]{0}', space=sflag, size = 0x4, scoped, tag = 'scoped memory for tpu_custom_call.1']
    #allocation11 [shape = 'u8[32768]{0}', space=vmem, size = 0x8000, scoped, tag = 'input window, operand 7, single buffered']
    #allocation12 [shape = 'u8[131072]{0}', space=vmem, size = 0x20000, scoped, tag = 'output window, operand 0']
    %20 = vsyncpa [#allocation4], 0
    %s21 = scalar_lea.sflag [#allocation4], 1
    %22 = vsyncpa %s21, 0
    %23 = vsyncpa [#allocation7], 0
    %24 = vsyncpa [#allocation10], 0
    %25 = vsyncpa [#allocation5], 0
    %s26 = scalar_lea.sflag [#allocation5], 1
    %27 = vsyncpa %s26, 0
    loop: start=0, step=1, limit=4
    $region2: #{tpu_custom_call.1} parent=1 // loop_pre_header
      _
    $region3: #{tpu_custom_call.1} parent=1 // loop_header
      %s29 = sphi 0, %s33
      %p30 = scmp.ge.s32.totalorder %s29, 4
      %s39 = sphi 0, %s41
      %s42 = sphi 0, %s39
      %s43 = sphi 0, %s42
      %s59 = sphi 0, %s43
      %s63 = sphi 0, %s63
      %s65 = sphi 0, %s63
      %s66 = sphi 0, %s65
      %s80 = sphi 0, %s66
      %s84 = sphi 0, %s84
      %s86 = sphi 0, %s84
      %s87 = sphi 0, %s86
      %s101 = sphi 0, %s87
      %s105 = sphi 0, %s105
      %s107 = sphi 0, %s105
      %s108 = sphi 0, %s107
      %s122 = sphi 0, %s108
      %s126 = sphi 0, %s126
      %s128 = sphi 0, %s126
      %s129 = sphi 0, %s128
      %s143 = sphi 0, %s129
      %s147 = sphi 0, %s147
      %s149 = sphi 0, %s147
      %s150 = sphi 0, %s149
      %s164 = sphi 0, %s150
      %s168 = sphi 0, %s168
      %s170 = sphi 0, %s168
      %s171 = sphi 0, %s170
      %s185 = sphi 0, %s171
      %s189 = sphi 0, %s189
      %s191 = sphi 0, %s189
      %s192 = sphi 0, %s191
      %s206 = sphi 0, %s192
      %s210 = sphi 0, %s210
      %s212 = sphi 0, %s210
      %s213 = sphi 0, %s212
      %s227 = sphi 0, %s213
      %s231 = sphi 0, %s231
      %s233 = sphi 0, %s231
      %s234 = sphi 0, %s233
      %s248 = sphi 0, %s234
      %s252 = sphi 0, %s252
      %s254 = sphi 0, %s252
      %s255 = sphi 0, %s254
      %s269 = sphi 0, %s255
      %s273 = sphi 0, %s273
      %s275 = sphi 0, %s273
      %s276 = sphi 0, %s275
      %s290 = sphi 0, %s276
      %s294 = sphi 0, %s294
      %s296 = sphi 0, %s294
      %s297 = sphi 0, %s296
      %s311 = sphi 0, %s297
      %s315 = sphi 0, %s315
      %s317 = sphi 0, %s315
      %s318 = sphi 0, %s317
      %s332 = sphi 0, %s318
      %s336 = sphi 0, %s336
      %s338 = sphi 0, %s336
      %s339 = sphi 0, %s338
      %s353 = sphi 0, %s339
      %s359 = sphi 0, %s361
      %s362 = sphi 0, %s359
      %s363 = sphi 0, %s362
      %s379 = sphi 0, %s363
    $region4: #{tpu_custom_call.1} parent=1 // loop_header_branch
      %32 = sbr.rel (%p30) target = $region8
    $region5: #{tpu_custom_call.1} parent=1 // loop_body
      %s34 = ssub.s32 %s29, 1
      %s35 = ssub.s32 %s29, 2
      %s36 = sadd.s32 %s29, 1
      %s37 = ssub.s32 %s29, %s36
      %p38 = scmp.eq.s32.totalorder %s37, 0
      %s40 = sadd.s32 %s39, 1
      %s41 = scalar_select %p38, %s39, %s40
      %p44 = pneg %p38
      %p45 = scmp.eq.s32.totalorder %s29, 1
      %p46 = por %p44, %p45
      %p47 = scmp.ne.s32.totalorder %s39, %s42
      %p48 = scmp.eq.s32.totalorder %s29, 0
      %p49 = por %p47, %p48
      %p50 = scmp.ne.s32.totalorder %s39, %s42
      %p51 = scmp.eq.s32.totalorder %s34, 1
      %p52 = por %p50, %p51
      %p53 = scmp.ne.s32.totalorder %s42, %s43
      %p54 = scmp.eq.s32.totalorder %s34, 0
      %p55 = por %p53, %p54
      %p56 = scmp.ne.s32.totalorder %s42, %s43
      %p57 = scmp.eq.s32.totalorder %s35, 1
      %p58 = por %p56, %p57
      %p60 = scmp.ne.s32.totalorder %s43, %s59
      %p61 = scmp.eq.s32.totalorder %s35, 0
      %p62 = por %p60, %p61
      %s64 = sadd.s32 %s63, 1
      %p67 = scmp.eq.s32.totalorder %s29, 1
      %p68 = scmp.ne.s32.totalorder %s63, %s65
      %p69 = scmp.eq.s32.totalorder %s29, 0
      %p70 = por %p68, %p69
      %p71 = scmp.ne.s32.totalorder %s63, %s65
      %p72 = scmp.eq.s32.totalorder %s34, 1
      %p73 = por %p71, %p72
      %p74 = scmp.ne.s32.totalorder %s65, %s66
      %p75 = scmp.eq.s32.totalorder %s34, 0
      %p76 = por %p74, %p75
      %p77 = scmp.ne.s32.totalorder %s65, %s66
      %p78 = scmp.eq.s32.totalorder %s35, 1
      %p79 = por %p77, %p78
      %p81 = scmp.ne.s32.totalorder %s66, %s80
      %p82 = scmp.eq.s32.totalorder %s35, 0
      %p83 = por %p81, %p82
      %s85 = sadd.s32 %s84, 1
      %p88 = scmp.eq.s32.totalorder %s29, 1
      %p89 = scmp.ne.s32.totalorder %s84, %s86
      %p90 = scmp.eq.s32.totalorder %s29, 0
      %p91 = por %p89, %p90
      %p92 = scmp.ne.s32.totalorder %s84, %s86
      %p93 = scmp.eq.s32.totalorder %s34, 1
      %p94 = por %p92, %p93
      %p95 = scmp.ne.s32.totalorder %s86, %s87
      %p96 = scmp.eq.s32.totalorder %s34, 0
      %p97 = por %p95, %p96
      %p98 = scmp.ne.s32.totalorder %s86, %s87
      %p99 = scmp.eq.s32.totalorder %s35, 1
      %p100 = por %p98, %p99
      %p102 = scmp.ne.s32.totalorder %s87, %s101
      %p103 = scmp.eq.s32.totalorder %s35, 0
      %p104 = por %p102, %p103
      %s106 = sadd.s32 %s105, 1
      %p109 = scmp.eq.s32.totalorder %s29, 1
      %p110 = scmp.ne.s32.totalorder %s105, %s107
      %p111 = scmp.eq.s32.totalorder %s29, 0
      %p112 = por %p110, %p111
      %p113 = scmp.ne.s32.totalorder %s105, %s107
      %p114 = scmp.eq.s32.totalorder %s34, 1
      %p115 = por %p113, %p114
      %p116 = scmp.ne.s32.totalorder %s107, %s108
      %p117 = scmp.eq.s32.totalorder %s34, 0
      %p118 = por %p116, %p117
      %p119 = scmp.ne.s32.totalorder %s107, %s108
      %p120 = scmp.eq.s32.totalorder %s35, 1
      %p121 = por %p119, %p120
      %p123 = scmp.ne.s32.totalorder %s108, %s122
      %p124 = scmp.eq.s32.totalorder %s35, 0
      %p125 = por %p123, %p124
      %s127 = sadd.s32 %s126, 1
      %p130 = scmp.eq.s32.totalorder %s29, 1
      %p131 = scmp.ne.s32.totalorder %s126, %s128
      %p132 = scmp.eq.s32.totalorder %s29, 0
      %p133 = por %p131, %p132
      %p134 = scmp.ne.s32.totalorder %s126, %s128
      %p135 = scmp.eq.s32.totalorder %s34, 1
      %p136 = por %p134, %p135
      %p137 = scmp.ne.s32.totalorder %s128, %s129
      %p138 = scmp.eq.s32.totalorder %s34, 0
      %p139 = por %p137, %p138
      %p140 = scmp.ne.s32.totalorder %s128, %s129
      %p141 = scmp.eq.s32.totalorder %s35, 1
      %p142 = por %p140, %p141
      %p144 = scmp.ne.s32.totalorder %s129, %s143
      %p145 = scmp.eq.s32.totalorder %s35, 0
      %p146 = por %p144, %p145
      %s148 = sadd.s32 %s147, 1
      %p151 = scmp.eq.s32.totalorder %s29, 1
      %p152 = scmp.ne.s32.totalorder %s147, %s149
      %p153 = scmp.eq.s32.totalorder %s29, 0
      %p154 = por %p152, %p153
      %p155 = scmp.ne.s32.totalorder %s147, %s149
      %p156 = scmp.eq.s32.totalorder %s34, 1
      %p157 = por %p155, %p156
      %p158 = scmp.ne.s32.totalorder %s149, %s150
      %p159 = scmp.eq.s32.totalorder %s34, 0
      %p160 = por %p158, %p159
      %p161 = scmp.ne.s32.totalorder %s149, %s150
      %p162 = scmp.eq.s32.totalorder %s35, 1
      %p163 = por %p161, %p162
      %p165 = scmp.ne.s32.totalorder %s150, %s164
      %p166 = scmp.eq.s32.totalorder %s35, 0
      %p167 = por %p165, %p166
      %s169 = sadd.s32 %s168, 1
      %p172 = scmp.eq.s32.totalorder %s29, 1
      %p173 = scmp.ne.s32.totalorder %s168, %s170
      %p174 = scmp.eq.s32.totalorder %s29, 0
      %p175 = por %p173, %p174
      %p176 = scmp.ne.s32.totalorder %s168, %s170
      %p177 = scmp.eq.s32.totalorder %s34, 1
      %p178 = por %p176, %p177
      %p179 = scmp.ne.s32.totalorder %s170, %s171
      %p180 = scmp.eq.s32.totalorder %s34, 0
      %p181 = por %p179, %p180
      %p182 = scmp.ne.s32.totalorder %s170, %s171
      %p183 = scmp.eq.s32.totalorder %s35, 1
      %p184 = por %p182, %p183
      %p186 = scmp.ne.s32.totalorder %s171, %s185
      %p187 = scmp.eq.s32.totalorder %s35, 0
      %p188 = por %p186, %p187
      %s190 = sadd.s32 %s189, 1
      %p193 = scmp.eq.s32.totalorder %s29, 1
      %p194 = scmp.ne.s32.totalorder %s189, %s191
      %p195 = scmp.eq.s32.totalorder %s29, 0
      %p196 = por %p194, %p195
      %p197 = scmp.ne.s32.totalorder %s189, %s191
      %p198 = scmp.eq.s32.totalorder %s34, 1
      %p199 = por %p197, %p198
      %p200 = scmp.ne.s32.totalorder %s191, %s192
      %p201 = scmp.eq.s32.totalorder %s34, 0
      %p202 = por %p200, %p201
      %p203 = scmp.ne.s32.totalorder %s191, %s192
      %p204 = scmp.eq.s32.totalorder %s35, 1
      %p205 = por %p203, %p204
      %p207 = scmp.ne.s32.totalorder %s192, %s206
      %p208 = scmp.eq.s32.totalorder %s35, 0
      %p209 = por %p207, %p208
      %s211 = sadd.s32 %s210, 1
      %p214 = scmp.eq.s32.totalorder %s29, 1
      %p215 = scmp.ne.s32.totalorder %s210, %s212
      %p216 = scmp.eq.s32.totalorder %s29, 0
      %p217 = por %p215, %p216
      %p218 = scmp.ne.s32.totalorder %s210, %s212
      %p219 = scmp.eq.s32.totalorder %s34, 1
      %p220 = por %p218, %p219
      %p221 = scmp.ne.s32.totalorder %s212, %s213
      %p222 = scmp.eq.s32.totalorder %s34, 0
      %p223 = por %p221, %p222
      %p224 = scmp.ne.s32.totalorder %s212, %s213
      %p225 = scmp.eq.s32.totalorder %s35, 1
      %p226 = por %p224, %p225
      %p228 = scmp.ne.s32.totalorder %s213, %s227
      %p229 = scmp.eq.s32.totalorder %s35, 0
      %p230 = por %p228, %p229
      %s232 = sadd.s32 %s231, 1
      %p235 = scmp.eq.s32.totalorder %s29, 1
      %p236 = scmp.ne.s32.totalorder %s231, %s233
      %p237 = scmp.eq.s32.totalorder %s29, 0
      %p238 = por %p236, %p237
      %p239 = scmp.ne.s32.totalorder %s231, %s233
      %p240 = scmp.eq.s32.totalorder %s34, 1
      %p241 = por %p239, %p240
      %p242 = scmp.ne.s32.totalorder %s233, %s234
      %p243 = scmp.eq.s32.totalorder %s34, 0
      %p244 = por %p242, %p243
      %p245 = scmp.ne.s32.totalorder %s233, %s234
      %p246 = scmp.eq.s32.totalorder %s35, 1
      %p247 = por %p245, %p246
      %p249 = scmp.ne.s32.totalorder %s234, %s248
      %p250 = scmp.eq.s32.totalorder %s35, 0
      %p251 = por %p249, %p250
      %s253 = sadd.s32 %s252, 1
      %p256 = scmp.eq.s32.totalorder %s29, 1
      %p257 = scmp.ne.s32.totalorder %s252, %s254
      %p258 = scmp.eq.s32.totalorder %s29, 0
      %p259 = por %p257, %p258
      %p260 = scmp.ne.s32.totalorder %s252, %s254
      %p261 = scmp.eq.s32.totalorder %s34, 1
      %p262 = por %p260, %p261
      %p263 = scmp.ne.s32.totalorder %s254, %s255
      %p264 = scmp.eq.s32.totalorder %s34, 0
      %p265 = por %p263, %p264
      %p266 = scmp.ne.s32.totalorder %s254, %s255
      %p267 = scmp.eq.s32.totalorder %s35, 1
      %p268 = por %p266, %p267
      %p270 = scmp.ne.s32.totalorder %s255, %s269
      %p271 = scmp.eq.s32.totalorder %s35, 0
      %p272 = por %p270, %p271
      %s274 = sadd.s32 %s273, 1
      %p277 = scmp.eq.s32.totalorder %s29, 1
      %p278 = scmp.ne.s32.totalorder %s273, %s275
      %p279 = scmp.eq.s32.totalorder %s29, 0
      %p280 = por %p278, %p279
      %p281 = scmp.ne.s32.totalorder %s273, %s275
      %p282 = scmp.eq.s32.totalorder %s34, 1
      %p283 = por %p281, %p282
      %p284 = scmp.ne.s32.totalorder %s275, %s276
      %p285 = scmp.eq.s32.totalorder %s34, 0
      %p286 = por %p284, %p285
      %p287 = scmp.ne.s32.totalorder %s275, %s276
      %p288 = scmp.eq.s32.totalorder %s35, 1
      %p289 = por %p287, %p288
      %p291 = scmp.ne.s32.totalorder %s276, %s290
      %p292 = scmp.eq.s32.totalorder %s35, 0
      %p293 = por %p291, %p292
      %s295 = sadd.s32 %s294, 1
      %p298 = scmp.eq.s32.totalorder %s29, 1
      %p299 = scmp.ne.s32.totalorder %s294, %s296
      %p300 = scmp.eq.s32.totalorder %s29, 0
      %p301 = por %p299, %p300
      %p302 = scmp.ne.s32.totalorder %s294, %s296
      %p303 = scmp.eq.s32.totalorder %s34, 1
      %p304 = por %p302, %p303
      %p305 = scmp.ne.s32.totalorder %s296, %s297
      %p306 = scmp.eq.s32.totalorder %s34, 0
      %p307 = por %p305, %p306
      %p308 = scmp.ne.s32.totalorder %s296, %s297
      %p309 = scmp.eq.s32.totalorder %s35, 1
      %p310 = por %p308, %p309
      %p312 = scmp.ne.s32.totalorder %s297, %s311
      %p313 = scmp.eq.s32.totalorder %s35, 0
      %p314 = por %p312, %p313
      %s316 = sadd.s32 %s315, 1
      %p319 = scmp.eq.s32.totalorder %s29, 1
      %p320 = scmp.ne.s32.totalorder %s315, %s317
      %p321 = scmp.eq.s32.totalorder %s29, 0
      %p322 = por %p320, %p321
      %p323 = scmp.ne.s32.totalorder %s315, %s317
      %p324 = scmp.eq.s32.totalorder %s34, 1
      %p325 = por %p323, %p324
      %p326 = scmp.ne.s32.totalorder %s317, %s318
      %p327 = scmp.eq.s32.totalorder %s34, 0
      %p328 = por %p326, %p327
      %p329 = scmp.ne.s32.totalorder %s317, %s318
      %p330 = scmp.eq.s32.totalorder %s35, 1
      %p331 = por %p329, %p330
      %p333 = scmp.ne.s32.totalorder %s318, %s332
      %p334 = scmp.eq.s32.totalorder %s35, 0
      %p335 = por %p333, %p334
      %s337 = sadd.s32 %s336, 1
      %p340 = scmp.eq.s32.totalorder %s29, 1
      %p341 = scmp.ne.s32.totalorder %s336, %s338
      %p342 = scmp.eq.s32.totalorder %s29, 0
      %p343 = por %p341, %p342
      %p344 = scmp.ne.s32.totalorder %s336, %s338
      %p345 = scmp.eq.s32.totalorder %s34, 1
      %p346 = por %p344, %p345
      %p347 = scmp.ne.s32.totalorder %s338, %s339
      %p348 = scmp.eq.s32.totalorder %s34, 0
      %p349 = por %p347, %p348
      %p350 = scmp.ne.s32.totalorder %s338, %s339
      %p351 = scmp.eq.s32.totalorder %s35, 1
      %p352 = por %p350, %p351
      %p354 = scmp.ne.s32.totalorder %s339, %s353
      %p355 = scmp.eq.s32.totalorder %s35, 0
      %p356 = por %p354, %p355
      %s357 = ssub.s32 %s29, %s36
      %p358 = scmp.eq.s32.totalorder %s357, 0
      %s360 = sadd.s32 %s359, 1
      %s361 = scalar_select %p358, %s359, %s360
      %p364 = pneg %p358
      %p365 = scmp.eq.s32.totalorder %s29, 1
      %p366 = por %p364, %p365
      %p367 = scmp.ne.s32.totalorder %s359, %s362
      %p368 = scmp.eq.s32.totalorder %s29, 0
      %p369 = por %p367, %p368
      %p370 = scmp.ne.s32.totalorder %s359, %s362
      %p371 = scmp.eq.s32.totalorder %s34, 1
      %p372 = por %p370, %p371
      %p373 = scmp.ne.s32.totalorder %s362, %s363
      %p374 = scmp.eq.s32.totalorder %s34, 0
      %p375 = por %p373, %p374
      %p376 = scmp.ne.s32.totalorder %s362, %s363
      %p377 = scmp.eq.s32.totalorder %s35, 1
      %p378 = por %p376, %p377
      %p380 = scmp.ne.s32.totalorder %s363, %s379
      %p381 = scmp.eq.s32.totalorder %s35, 0
      %p382 = por %p380, %p381
      %p383 = scmp.le.s32.totalorder 1, %s29
      %p384 = scmp.lt.s32.totalorder %s29, 3
      %p385 = pnand %p383, %p384
      %p386 = pneg %p385
      // Predicated region
      $region9: #{tpu_custom_call.1} parent=5 // pred_check
        _
      $region10: #{tpu_custom_call.1} parent=5 // pred_check_branch
        %388 = sbr.rel (%p385) target = $region12
      $region11: #{tpu_custom_call.1} parent=5 // pred_region
        %s389 = ssub.s32 %s29, 1
        // Predicated region
        $region13: #{tpu_custom_call.1} parent=11 // pred_check
          %p390 = pneg %p76
        $region14: #{tpu_custom_call.1} parent=11 // pred_check_branch
          %392 = sbr.rel (%p390) target = $region16
        $region15: #{tpu_custom_call.1} parent=11 // pred_region
          %s394 = ssub.s32 1024, 1024
          %395 = vsyncadd [#allocation7], %s394
          %s396 = sshll.u32 [#allocation6], 4
          %s397 = int_to_ptr.vmem [resolvable:$true] %s396
          %402 = dma.hbm_to_vmem [thread:$0]  %s1, 1024, %s397, [#allocation7], 64, 64, 4
        $region16: #{tpu_custom_call.1} parent=11 // pred_fallthru
          _
        // Predicated region
        $region17: #{tpu_custom_call.1} parent=11 // pred_check
          %p403 = pneg %p97
        $region18: #{tpu_custom_call.1} parent=11 // pred_check_branch
          %405 = sbr.rel (%p403) target = $region20
        $region19: #{tpu_custom_call.1} parent=11 // pred_region
          _
        $region20: #{tpu_custom_call.1} parent=11 // pred_fallthru
          _
        // Predicated region
        $region21: #{tpu_custom_call.1} parent=11 // pred_check
          %p406 = pneg %p118
        $region22: #{tpu_custom_call.1} parent=11 // pred_check_branch
          %408 = sbr.rel (%p406) target = $region24
        $region23: #{tpu_custom_call.1} parent=11 // pred_region
          %s410 = ssub.s32 1024, 1024
          %411 = vsyncadd [#allocation7], %s410
          %s412 = sshll.u32 [#allocation8], 4
          %s413 = int_to_ptr.vmem [resolvable:$true] %s412
          %418 = dma.hbm_to_vmem [thread:$0]  %s3, 1024, %s413, [#allocation7], 64, 64, 4
        $region24: #{tpu_custom_call.1} parent=11 // pred_fallthru
          _
        // Predicated region
        $region25: #{tpu_custom_call.1} parent=11 // pred_check
          %p419 = pneg %p139
        $region26: #{tpu_custom_call.1} parent=11 // pred_check_branch
          %421 = sbr.rel (%p419) target = $region28
        $region27: #{tpu_custom_call.1} parent=11 // pred_region
          _
        $region28: #{tpu_custom_call.1} parent=11 // pred_fallthru
          _
        // Predicated region
        $region29: #{tpu_custom_call.1} parent=11 // pred_check
          %p422 = pneg %p160
        $region30: #{tpu_custom_call.1} parent=11 // pred_check_branch
          %424 = sbr.rel (%p422) target = $region32
        $region31: #{tpu_custom_call.1} parent=11 // pred_region
          %s426 = ssub.s32 1024, 1024
          %427 = vsyncadd [#allocation10], %s426
          %s428 = sshll.u32 [#allocation9], 4
          %s429 = int_to_ptr.vmem [resolvable:$true] %s428
          %434 = dma.hbm_to_vmem [thread:$0]  %s5, 1024, %s429, [#allocation10], 64, 64, 4
        $region32: #{tpu_custom_call.1} parent=11 // pred_fallthru
          _
        // Predicated region
        $region33: #{tpu_custom_call.1} parent=11 // pred_check
          %p435 = pneg %p181
        $region34: #{tpu_custom_call.1} parent=11 // pred_check_branch
          %437 = sbr.rel (%p435) target = $region36
        $region35: #{tpu_custom_call.1} parent=11 // pred_region
          _
        $region36: #{tpu_custom_call.1} parent=11 // pred_fallthru
          _
        // Predicated region
        $region37: #{tpu_custom_call.1} parent=11 // pred_check
          %p438 = pneg %p202
        $region38: #{tpu_custom_call.1} parent=11 // pred_check_branch
          %440 = sbr.rel (%p438) target = $region40
        $region39: #{tpu_custom_call.1} parent=11 // pred_region
          %s442 = ssub.s32 1024, 1024
          %443 = vsyncadd [#allocation10], %s442
          %s444 = sshll.u32 [#allocation11], 4
          %s445 = int_to_ptr.vmem [resolvable:$true] %s444
          %450 = dma.hbm_to_vmem [thread:$0]  %s7, 1024, %s445, [#allocation10], 64, 64, 4
        $region40: #{tpu_custom_call.1} parent=11 // pred_fallthru
          _
        // Predicated region
        $region41: #{tpu_custom_call.1} parent=11 // pred_check
          %p451 = pneg %p223
        $region42: #{tpu_custom_call.1} parent=11 // pred_check_branch
          %453 = sbr.rel (%p451) target = $region44
        $region43: #{tpu_custom_call.1} parent=11 // pred_region
          _
        $region44: #{tpu_custom_call.1} parent=11 // pred_fallthru
          _
        // Predicated region
        $region45: #{tpu_custom_call.1} parent=11 // pred_check
          %p454 = pneg %p244
        $region46: #{tpu_custom_call.1} parent=11 // pred_check_branch
          %456 = sbr.rel (%p454) target = $region48
        $region47: #{tpu_custom_call.1} parent=11 // pred_region
          _
        $region48: #{tpu_custom_call.1} parent=11 // pred_fallthru
          _
        // Predicated region
        $region49: #{tpu_custom_call.1} parent=11 // pred_check
          %p457 = pneg %p265
        $region50: #{tpu_custom_call.1} parent=11 // pred_check_branch
          %459 = sbr.rel (%p457) target = $region52
        $region51: #{tpu_custom_call.1} parent=11 // pred_region
          _
        $region52: #{tpu_custom_call.1} parent=11 // pred_fallthru
          _
        // Predicated region
        $region53: #{tpu_custom_call.1} parent=11 // pred_check
          %p460 = pneg %p286
        $region54: #{tpu_custom_call.1} parent=11 // pred_check_branch
          %462 = sbr.rel (%p460) target = $region56
        $region55: #{tpu_custom_call.1} parent=11 // pred_region
          _
        $region56: #{tpu_custom_call.1} parent=11 // pred_fallthru
          _
        // Predicated region
        $region57: #{tpu_custom_call.1} parent=11 // pred_check
          %p463 = pneg %p307
        $region58: #{tpu_custom_call.1} parent=11 // pred_check_branch
          %465 = sbr.rel (%p463) target = $region60
        $region59: #{tpu_custom_call.1} parent=11 // pred_region
          _
        $region60: #{tpu_custom_call.1} parent=11 // pred_fallthru
          _
        // Predicated region
        $region61: #{tpu_custom_call.1} parent=11 // pred_check
          %p466 = pneg %p328
        $region62: #{tpu_custom_call.1} parent=11 // pred_check_branch
          %468 = sbr.rel (%p466) target = $region64
        $region63: #{tpu_custom_call.1} parent=11 // pred_region
          _
        $region64: #{tpu_custom_call.1} parent=11 // pred_fallthru
          _
        // Predicated region
        $region65: #{tpu_custom_call.1} parent=11 // pred_check
          %p469 = pneg %p349
        $region66: #{tpu_custom_call.1} parent=11 // pred_check_branch
          %471 = sbr.rel (%p469) target = $region68
        $region67: #{tpu_custom_call.1} parent=11 // pred_region
          _
        $region68: #{tpu_custom_call.1} parent=11 // pred_fallthru
          _
      $region12: #{tpu_custom_call.1} parent=5 // pred_fallthru
        _
      %p472 = scmp.lt.s32.totalorder %s29, 2
      // Predicated region
      $region69: #{tpu_custom_call.1} parent=5 // pred_check
        %p473 = pneg %p472
      $region70: #{tpu_custom_call.1} parent=5 // pred_check_branch
        %475 = sbr.rel (%p473) target = $region72
      $region71: #{tpu_custom_call.1} parent=5 // pred_region
        // Predicated region
        $region73: #{tpu_custom_call.1} parent=71 // pred_check
          %p476 = pneg %p49
        $region74: #{tpu_custom_call.1} parent=71 // pred_check_branch
          %478 = sbr.rel (%p476) target = $region76
        $region75: #{tpu_custom_call.1} parent=71 // pred_region
          %s479 = sand.u32 %s39, 1
          %s480 = scalar_lea.sflag [#allocation4], %s479
          %s481 = sand.u32 %s39, 1
          %s482 = smul.addr %s481, 128
          %s483 = scalar_lea.vmem [#allocation3], %s482
          %s484 = smul.u32 16, %s29
          %s486 = ssub.s32 2048, 2048
          %487 = vsyncadd %s480, %s486
          %s488 = smul.addr %s484, 128
          %s489 = scalar_lea.hbm %s0, %s488
          %s490 = sshll.u32 %s483, 4
          %s491 = int_to_ptr.vmem [resolvable:$true] %s490
          %496 = dma.hbm_to_vmem [thread:$0]  %s489, 2048, %s491, %s480, 128, 128, 8
        $region76: #{tpu_custom_call.1} parent=71 // pred_fallthru
          _
      $region72: #{tpu_custom_call.1} parent=5 // pred_fallthru
        _
      %p497 = scmp.le.s32.totalorder 1, %s29
      %p498 = scmp.lt.s32.totalorder %s29, 3
      %p499 = pnand %p497, %p498
      %p500 = pneg %p499
      // Predicated region
      $region77: #{tpu_custom_call.1} parent=5 // pred_check
        _
      $region78: #{tpu_custom_call.1} parent=5 // pred_check_branch
        %502 = sbr.rel (%p499) target = $region80
      $region79: #{tpu_custom_call.1} parent=5 // pred_region
        %s503 = ssub.s32 %s29, 1
        %s504 = sand.u32 %s42, 1
        %s505 = scalar_lea.sflag [#allocation4], %s504
        %s506 = sand.u32 %s42, 1
        %s507 = smul.addr %s506, 128
        %s508 = scalar_lea.vmem [#allocation3], %s507
        // Predicated region
        $region81: #{tpu_custom_call.1} parent=79 // pred_check
          %p509 = pneg %p55
        $region82: #{tpu_custom_call.1} parent=79 // pred_check_branch
          %511 = sbr.rel (%p509) target = $region84
        $region83: #{tpu_custom_call.1} parent=79 // pred_region
          %512 = dma.done %s505, 2048
        $region84: #{tpu_custom_call.1} parent=79 // pred_fallthru
          _
        // Predicated region
        $region85: #{tpu_custom_call.1} parent=79 // pred_check
          %p513 = pneg %p76
        $region86: #{tpu_custom_call.1} parent=79 // pred_check_branch
          %515 = sbr.rel (%p513) target = $region88
        $region87: #{tpu_custom_call.1} parent=79 // pred_region
          %516 = dma.done [#allocation7], 1024
        $region88: #{tpu_custom_call.1} parent=79 // pred_fallthru
          _
        // Predicated region
        $region89: #{tpu_custom_call.1} parent=79 // pred_check
          %p517 = pneg %p118
        $region90: #{tpu_custom_call.1} parent=79 // pred_check_branch
          %519 = sbr.rel (%p517) target = $region92
        $region91: #{tpu_custom_call.1} parent=79 // pred_region
          %520 = dma.done [#allocation7], 1024
        $region92: #{tpu_custom_call.1} parent=79 // pred_fallthru
          _
        // Predicated region
        $region93: #{tpu_custom_call.1} parent=79 // pred_check
          %p521 = pneg %p160
        $region94: #{tpu_custom_call.1} parent=79 // pred_check_branch
          %523 = sbr.rel (%p521) target = $region96
        $region95: #{tpu_custom_call.1} parent=79 // pred_region
          %524 = dma.done [#allocation10], 1024
        $region96: #{tpu_custom_call.1} parent=79 // pred_fallthru
          _
        // Predicated region
        $region97: #{tpu_custom_call.1} parent=79 // pred_check
          %p525 = pneg %p202
        $region98: #{tpu_custom_call.1} parent=79 // pred_check_branch
          %527 = sbr.rel (%p525) target = $region100
        $region99: #{tpu_custom_call.1} parent=79 // pred_region
          %528 = dma.done [#allocation10], 1024
        $region100: #{tpu_custom_call.1} parent=79 // pred_fallthru
          _
        %s529 = sand.u32 %s42, 1
        %s530 = scalar_lea.sflag [#allocation4], %s529
        %s531 = sand.u32 %s42, 1
        %s532 = smul.addr %s531, 128
        %s533 = scalar_lea.vmem [#allocation3], %s532
        %p534 = pneg %p55
        %p535 = pneg %p52
        %p536 = pneg %p76
        %p537 = pneg %p73
        %p538 = pneg %p97
        %p539 = pneg %p94
        %p540 = pneg %p118
        %p541 = pneg %p115
        %p542 = pneg %p139
        %p543 = pneg %p136
        %p544 = pneg %p160
        %p545 = pneg %p157
        %p546 = pneg %p181
        %p547 = pneg %p178
        %p548 = pneg %p202
        %p549 = pneg %p199
        %p550 = pneg %p223
        %p551 = pneg %p220
        %p552 = pneg %p244
        %p553 = pneg %p241
        %p554 = pneg %p265
        %p555 = pneg %p262
        %p556 = pneg %p286
        %p557 = pneg %p283
        %p558 = pneg %p307
        %p559 = pneg %p304
        %p560 = pneg %p328
        %p561 = pneg %p325
        %p562 = pneg %p349
        %p563 = pneg %p346
        %p564 = pneg %p375
        %p565 = pneg %p372
        %s566 = sand.u32 %s362, 1
        %s567 = scalar_lea.sflag [#allocation5], %s566
        %s568 = sand.u32 %s362, 1
        %s569 = smul.addr %s568, 128
        %s570 = scalar_lea.vmem [#allocation12], %s569
        %s571 = smul.u32 16, %s34
        %s572 = smul.u32 16, %s34
        %v574 = vld [vmem:[%s508] sm:$0xff]
        %v575 = vld [vmem:[%s508 + $0x8] sm:$0xff]
        %v576 = vld [vmem:[%s508 + $0x10] sm:$0xff]
        %v577 = vld [vmem:[%s508 + $0x18] sm:$0xff]
        %v578 = vld [vmem:[%s508 + $0x20] sm:$0xff]
        %v579 = vld [vmem:[%s508 + $0x28] sm:$0xff]
        %v580 = vld [vmem:[%s508 + $0x30] sm:$0xff]
        %v581 = vld [vmem:[%s508 + $0x38] sm:$0xff]
        %v582 = vld [vmem:[%s508 + $0x40] sm:$0xff]
        %v583 = vld [vmem:[%s508 + $0x48] sm:$0xff]
        %v584 = vld [vmem:[%s508 + $0x50] sm:$0xff]
        %v585 = vld [vmem:[%s508 + $0x58] sm:$0xff]
        %v586 = vld [vmem:[%s508 + $0x60] sm:$0xff]
        %v587 = vld [vmem:[%s508 + $0x68] sm:$0xff]
        %v588 = vld [vmem:[%s508 + $0x70] sm:$0xff]
        %v589 = vld [vmem:[%s508 + $0x78] sm:$0xff]
        %v590 = vpack.c.bf16 %v575, %v574
        %v591 = vpack.c.bf16 %v577, %v576
        %v592 = vpack.c.bf16 %v579, %v578
        %v593 = vpack.c.bf16 %v581, %v580
        %v594 = vpack.c.bf16 %v583, %v582
        %v595 = vpack.c.bf16 %v585, %v584
        %v596 = vpack.c.bf16 %v587, %v586
        %v597 = vpack.c.bf16 %v589, %v588
        %v598 = vld [vmem:[#allocation6] sm:$0xf]
        %v599 = vld [vmem:[#allocation6 + $0x4] sm:$0xf]
        %v600 = vld [vmem:[#allocation6 + $0x8] sm:$0xf]
        %v601 = vld [vmem:[#allocation6 + $0xc] sm:$0xf]
        %v602 = vld [vmem:[#allocation6 + $0x10] sm:$0xf]
        %v603 = vld [vmem:[#allocation6 + $0x14] sm:$0xf]
        %v604 = vld [vmem:[#allocation6 + $0x18] sm:$0xf]
        %v605 = vld [vmem:[#allocation6 + $0x1c] sm:$0xf]
        %v606 = vld [vmem:[#allocation6 + $0x20] sm:$0xf]
        %v607 = vld [vmem:[#allocation6 + $0x24] sm:$0xf]
        %v608 = vld [vmem:[#allocation6 + $0x28] sm:$0xf]
        %v609 = vld [vmem:[#allocation6 + $0x2c] sm:$0xf]
        %v610 = vld [vmem:[#allocation6 + $0x30] sm:$0xf]
        %v611 = vld [vmem:[#allocation6 + $0x34] sm:$0xf]
        %v612 = vld [vmem:[#allocation6 + $0x38] sm:$0xf]
        %v613 = vld [vmem:[#allocation6 + $0x3c] sm:$0xf]
        %v614 = vld [vmem:[%s2] sm:$0x1]
        %v616 = vlaneseq
        %v617 = vshrl.u32 %v616, 7
        %v618 = vsub.s32 0, %v617
        %v619 = vrot.slane %v614, %v618
        %v637 = vunpack.c.l.b16 %v598
        %v638 = vunpack.c.l.b16 %v599
        %v639 = vunpack.c.l.b16 %v600
        %v640 = vunpack.c.l.b16 %v601
        %v641 = vunpack.c.l.b16 %v602
        %v642 = vunpack.c.l.b16 %v603
        %v643 = vunpack.c.l.b16 %v604
        %v644 = vunpack.c.l.b16 %v605
        %v645 = vunpack.c.l.b16 %v606
        %v646 = vunpack.c.l.b16 %v607
        %v647 = vunpack.c.l.b16 %v608
        %v648 = vunpack.c.l.b16 %v609
        %v649 = vunpack.c.l.b16 %v610
        %v650 = vunpack.c.l.b16 %v611
        %v651 = vunpack.c.l.b16 %v612
        %v652 = vunpack.c.l.b16 %v613
        %v653 = vpack.c.b16 %v638, %v637
        %v654 = vpack.c.b16 %v640, %v639
        %v655 = vpack.c.b16 %v642, %v641
        %v656 = vpack.c.b16 %v644, %v643
        %v657 = vpack.c.b16 %v646, %v645
        %v658 = vpack.c.b16 %v648, %v647
        %v659 = vpack.c.b16 %v650, %v649
        %v660 = vpack.c.b16 %v652, %v651
        %669 = vmatprep.subr.bf16.mxu0 0
        %670 = vmatpush1.bf16.msra.mxu0 %v653
        %671 = vmatprep.subr.bf16.mxu0 0
        %672 = vmatpush1.bf16.msra.mxu0 %v654
        %673 = vmatprep.subr.bf16.mxu0 0
        %674 = vmatpush1.bf16.msra.mxu0 %v655
        %675 = vmatprep.subr.bf16.mxu0 0
        %676 = vmatpush1.bf16.msra.mxu0 %v656
        %677 = vmatprep.subr.bf16.mxu0 0
        %678 = vmatpush1.bf16.msra.mxu0 %v657
        %679 = vmatprep.subr.bf16.mxu0 0
        %680 = vmatpush1.bf16.msra.mxu0 %v658
        %681 = vmatprep.subr.bf16.mxu0 0
        %682 = vmatpush1.bf16.msra.mxu0 %v659
        %683 = vmatprep.subr.bf16.mxu0 0
        %684 = vmatpush1.bf16.msra.mxu0 %v660
        %685 = vmatprep.subr.bf16.mxu0 0
        %686 = vmatpush1.bf16.msra.mxu0 0
        %687 = vmatprep.subr.bf16.mxu0 0
        %688 = vmatpush1.bf16.msra.mxu0 0
        %689 = vmatprep.subr.bf16.mxu0 0
        %690 = vmatpush1.bf16.msra.mxu0 0
        %691 = vmatprep.subr.bf16.mxu0 0
        %692 = vmatpush1.bf16.msra.mxu0 0
        %693 = vmatprep.subr.bf16.mxu0 0
        %694 = vmatpush1.bf16.msra.mxu0 0
        %695 = vmatprep.subr.bf16.mxu0 0
        %696 = vmatpush1.bf16.msra.mxu0 0
        %697 = vmatprep.subr.bf16.mxu0 0
        %698 = vmatpush1.bf16.msra.mxu0 0
        %699 = vmatprep.subr.bf16.mxu0 0
        %700 = vmatpush1.bf16.msra.mxu0 0
        %701 = vmatprep.mubr.bf16.mxu0 0
        %702 = vmatmul.mubr.bf16.gmra.mrb[0].mxu0 %v590
        %v703 = vpop.f32.mrb[0].mxu0
        %v704 = vadd.f32 %v619, %v703
        %v705 = vpop.f32.mrb[0].mxu0
        %v706 = vpop.f32.mrb[0].mxu0
        %v707 = vadd.f32 %v619, %v706
        %v708 = vpop.f32.mrb[0].mxu0
        %709 = vmatprep.mubr.bf16.mxu0 0
        %710 = vmatmul.mubr.bf16.gmra.mrb[0].mxu0 %v591
        %v711 = vpop.f32.mrb[0].mxu0
        %v712 = vadd.f32 %v619, %v711
        %v713 = vpop.f32.mrb[0].mxu0
        %v714 = vpop.f32.mrb[0].mxu0
        %v715 = vadd.f32 %v619, %v714
        %v716 = vpop.f32.mrb[0].mxu0
        %717 = vmatprep.mubr.bf16.mxu0 0
        %718 = vmatmul.mubr.bf16.gmra.mrb[0].mxu0 %v592
        %v719 = vpop.f32.mrb[0].mxu0
        %v720 = vadd.f32 %v619, %v719
        %v721 = vpop.f32.mrb[0].mxu0
        %v722 = vpop.f32.mrb[0].mxu0
        %v723 = vadd.f32 %v619, %v722
        %v724 = vpop.f32.mrb[0].mxu0
        %725 = vmatprep.mubr.bf16.mxu0 0
        %726 = vmatmul.mubr.bf16.gmra.mrb[0].mxu0 %v593
        %v727 = vpop.f32.mrb[0].mxu0
        %v728 = vadd.f32 %v619, %v727
        %v729 = vpop.f32.mrb[0].mxu0
        %v730 = vpop.f32.mrb[0].mxu0
        %v731 = vadd.f32 %v619, %v730
        %v732 = vpop.f32.mrb[0].mxu0
        %733 = vmatprep.mubr.bf16.mxu0 0
        %734 = vmatmul.mubr.bf16.gmra.mrb[0].mxu0 %v594
        %v735 = vpop.f32.mrb[0].mxu0
        %v736 = vadd.f32 %v619, %v735
        %v737 = vpop.f32.mrb[0].mxu0
        %v738 = vpop.f32.mrb[0].mxu0
        %v739 = vadd.f32 %v619, %v738
        %v740 = vpop.f32.mrb[0].mxu0
        %741 = vmatprep.mubr.bf16.mxu0 0
        %742 = vmatmul.mubr.bf16.gmra.mrb[0].mxu0 %v595
        %v743 = vpop.f32.mrb[0].mxu0
        %v744 = vadd.f32 %v619, %v743
        %v745 = vpop.f32.mrb[0].mxu0
        %v746 = vpop.f32.mrb[0].mxu0
        %v747 = vadd.f32 %v619, %v746
        %v748 = vpop.f32.mrb[0].mxu0
        %749 = vmatprep.mubr.bf16.mxu0 0
        %750 = vmatmul.mubr.bf16.gmra.mrb[0].mxu0 %v596
        %v751 = vpop.f32.mrb[0].mxu0
        %v752 = vadd.f32 %v619, %v751
        %v753 = vpop.f32.mrb[0].mxu0
        %v754 = vpop.f32.mrb[0].mxu0
        %v755 = vadd.f32 %v619, %v754
        %v756 = vpop.f32.mrb[0].mxu0
        %757 = vmatprep.mubr.bf16.mxu0 0
        %758 = vmatmul.mubr.bf16.gmra.mrb[0].mxu0 %v597
        %v759 = vpop.f32.mrb[0].mxu0
        %v760 = vadd.f32 %v619, %v759
        %v761 = vpop.f32.mrb[0].mxu0
        %v762 = vpop.f32.mrb[0].mxu0
        %v763 = vadd.f32 %v619, %v762
        %v764 = vpop.f32.mrb[0].mxu0
        %765 = vdwg.mxu0
        %v766 = vmax.f32 %v704, 0.0
        %v767 = vmax.f32 %v707, 0.0
        %v768 = vmax.f32 %v712, 0.0
        %v769 = vmax.f32 %v715, 0.0
        %v770 = vmax.f32 %v720, 0.0
        %v771 = vmax.f32 %v723, 0.0
        %v772 = vmax.f32 %v728, 0.0
        %v773 = vmax.f32 %v731, 0.0
        %v774 = vmax.f32 %v736, 0.0
        %v775 = vmax.f32 %v739, 0.0
        %v776 = vmax.f32 %v744, 0.0
        %v777 = vmax.f32 %v747, 0.0
        %v778 = vmax.f32 %v752, 0.0
        %v779 = vmax.f32 %v755, 0.0
        %v780 = vmax.f32 %v760, 0.0
        %v781 = vmax.f32 %v763, 0.0
        %v782 = vpack.c.bf16 %v767, %v766
        %v783 = vpack.c.bf16 %v769, %v768
        %v784 = vpack.c.bf16 %v771, %v770
        %v785 = vpack.c.bf16 %v773, %v772
        %v786 = vpack.c.bf16 %v775, %v774
        %v787 = vpack.c.bf16 %v777, %v776
        %v788 = vpack.c.bf16 %v779, %v778
        %v789 = vpack.c.bf16 %v781, %v780
        %v790 = vld [vmem:[#allocation8] sm:$0xf]
        %v791 = vld [vmem:[#allocation8 + $0x4] sm:$0xf]
        %v792 = vld [vmem:[#allocation8 + $0x8] sm:$0xf]
        %v793 = vld [vmem:[#allocation8 + $0xc] sm:$0xf]
        %v794 = vld [vmem:[#allocation8 + $0x10] sm:$0xf]
        %v795 = vld [vmem:[#allocation8 + $0x14] sm:$0xf]
        %v796 = vld [vmem:[#allocation8 + $0x18] sm:$0xf]
        %v797 = vld [vmem:[#allocation8 + $0x1c] sm:$0xf]
        %v798 = vld [vmem:[#allocation8 + $0x20] sm:$0xf]
        %v799 = vld [vmem:[#allocation8 + $0x24] sm:$0xf]
        %v800 = vld [vmem:[#allocation8 + $0x28] sm:$0xf]
        %v801 = vld [vmem:[#allocation8 + $0x2c] sm:$0xf]
        %v802 = vld [vmem:[#allocation8 + $0x30] sm:$0xf]
        %v803 = vld [vmem:[#allocation8 + $0x34] sm:$0xf]
        %v804 = vld [vmem:[#allocation8 + $0x38] sm:$0xf]
        %v805 = vld [vmem:[#allocation8 + $0x3c] sm:$0xf]
        %v806 = vld [vmem:[%s4] sm:$0x1]
        %v808 = vlaneseq
        %v809 = vshrl.u32 %v808, 7
        %v810 = vsub.s32 0, %v809
        %v811 = vrot.slane %v806, %v810
        %v829 = vunpack.c.l.b16 %v790
        %v830 = vunpack.c.l.b16 %v791
        %v831 = vunpack.c.l.b16 %v792
        %v832 = vunpack.c.l.b16 %v793
        %v833 = vunpack.c.l.b16 %v794
        %v834 = vunpack.c.l.b16 %v795
        %v835 = vunpack.c.l.b16 %v796
        %v836 = vunpack.c.l.b16 %v797
        %v837 = vunpack.c.l.b16 %v798
        %v838 = vunpack.c.l.b16 %v799
        %v839 = vunpack.c.l.b16 %v800
        %v840 = vunpack.c.l.b16 %v801
        %v841 = vunpack.c.l.b16 %v802
        %v842 = vunpack.c.l.b16 %v803
        %v843 = vunpack.c.l.b16 %v804
        %v844 = vunpack.c.l.b16 %v805
        %v845 = vpack.c.b16 %v830, %v829
        %v846 = vpack.c.b16 %v832, %v831
        %v847 = vpack.c.b16 %v834, %v833
        %v848 = vpack.c.b16 %v836, %v835
        %v849 = vpack.c.b16 %v838, %v837
        %v850 = vpack.c.b16 %v840, %v839
        %v851 = vpack.c.b16 %v842, %v841
        %v852 = vpack.c.b16 %v844, %v843
        %861 = vmatprep.subr.bf16.mxu0 0
        %862 = vmatpush1.bf16.msra.mxu0 %v845
        %863 = vmatprep.subr.bf16.mxu0 0
        %864 = vmatpush1.bf16.msra.mxu0 %v846
        %865 = vmatprep.subr.bf16.mxu0 0
        %866 = vmatpush1.bf16.msra.mxu0 %v847
        %867 = vmatprep.subr.bf16.mxu0 0
        %868 = vmatpush1.bf16.msra.mxu0 %v848
        %869 = vmatprep.subr.bf16.mxu0 0
        %870 = vmatpush1.bf16.msra.mxu0 %v849
        %871 = vmatprep.subr.bf16.mxu0 0
        %872 = vmatpush1.bf16.msra.mxu0 %v850
        %873 = vmatprep.subr.bf16.mxu0 0
        %874 = vmatpush1.bf16.msra.mxu0 %v851
        %875 = vmatprep.subr.bf16.mxu0 0
        %876 = vmatpush1.bf16.msra.mxu0 %v852
        %877 = vmatprep.subr.bf16.mxu0 0
        %878 = vmatpush1.bf16.msra.mxu0 0
        %879 = vmatprep.subr.bf16.mxu0 0
        %880 = vmatpush1.bf16.msra.mxu0 0
        %881 = vmatprep.subr.bf16.mxu0 0
        %882 = vmatpush1.bf16.msra.mxu0 0
        %883 = vmatprep.subr.bf16.mxu0 0
        %884 = vmatpush1.bf16.msra.mxu0 0
        %885 = vmatprep.subr.bf16.mxu0 0
        %886 = vmatpush1.bf16.msra.mxu0 0
        %887 = vmatprep.subr.bf16.mxu0 0
        %888 = vmatpush1.bf16.msra.mxu0 0
        %889 = vmatprep.subr.bf16.mxu0 0
        %890 = vmatpush1.bf16.msra.mxu0 0
        %891 = vmatprep.subr.bf16.mxu0 0
        %892 = vmatpush1.bf16.msra.mxu0 0
        %893 = vmatprep.mubr.bf16.mxu0 0
        %894 = vmatmul.mubr.bf16.gmra.mrb[0].mxu0 %v782
        %v895 = vpop.f32.mrb[0].mxu0
        %v896 = vadd.f32 %v811, %v895
        %v897 = vpop.f32.mrb[0].mxu0
        %v898 = vpop.f32.mrb[0].mxu0
        %v899 = vadd.f32 %v811, %v898
        %v900 = vpop.f32.mrb[0].mxu0
        %901 = vmatprep.mubr.bf16.mxu0 0
        %902 = vmatmul.mubr.bf16.gmra.mrb[0].mxu0 %v783
        %v903 = vpop.f32.mrb[0].mxu0
        %v904 = vadd.f32 %v811, %v903
        %v905 = vpop.f32.mrb[0].mxu0
        %v906 = vpop.f32.mrb[0].mxu0
        %v907 = vadd.f32 %v811, %v906
        %v908 = vpop.f32.mrb[0].mxu0
        %909 = vmatprep.mubr.bf16.mxu0 0
        %910 = vmatmul.mubr.bf16.gmra.mrb[0].mxu0 %v784
        %v911 = vpop.f32.mrb[0].mxu0
        %v912 = vadd.f32 %v811, %v911
        %v913 = vpop.f32.mrb[0].mxu0
        %v914 = vpop.f32.mrb[0].mxu0
        %v915 = vadd.f32 %v811, %v914
        %v916 = vpop.f32.mrb[0].mxu0
        %917 = vmatprep.mubr.bf16.mxu0 0
        %918 = vmatmul.mubr.bf16.gmra.mrb[0].mxu0 %v785
        %v919 = vpop.f32.mrb[0].mxu0
        %v920 = vadd.f32 %v811, %v919
        %v921 = vpop.f32.mrb[0].mxu0
        %v922 = vpop.f32.mrb[0].mxu0
        %v923 = vadd.f32 %v811, %v922
        %v924 = vpop.f32.mrb[0].mxu0
        %925 = vmatprep.mubr.bf16.mxu0 0
        %926 = vmatmul.mubr.bf16.gmra.mrb[0].mxu0 %v786
        %v927 = vpop.f32.mrb[0].mxu0
        %v928 = vadd.f32 %v811, %v927
        %v929 = vpop.f32.mrb[0].mxu0
        %v930 = vpop.f32.mrb[0].mxu0
        %v931 = vadd.f32 %v811, %v930
        %v932 = vpop.f32.mrb[0].mxu0
        %933 = vmatprep.mubr.bf16.mxu0 0
        %934 = vmatmul.mubr.bf16.gmra.mrb[0].mxu0 %v787
        %v935 = vpop.f32.mrb[0].mxu0
        %v936 = vadd.f32 %v811, %v935
        %v937 = vpop.f32.mrb[0].mxu0
        %v938 = vpop.f32.mrb[0].mxu0
        %v939 = vadd.f32 %v811, %v938
        %v940 = vpop.f32.mrb[0].mxu0
        %941 = vmatprep.mubr.bf16.mxu0 0
        %942 = vmatmul.mubr.bf16.gmra.mrb[0].mxu0 %v788
        %v943 = vpop.f32.mrb[0].mxu0
        %v944 = vadd.f32 %v811, %v943
        %v945 = vpop.f32.mrb[0].mxu0
        %v946 = vpop.f32.mrb[0].mxu0
        %v947 = vadd.f32 %v811, %v946
        %v948 = vpop.f32.mrb[0].mxu0
        %949 = vmatprep.mubr.bf16.mxu0 0
        %950 = vmatmul.mubr.bf16.gmra.mrb[0].mxu0 %v789
        %v951 = vpop.f32.mrb[0].mxu0
        %v952 = vadd.f32 %v811, %v951
        %v953 = vpop.f32.mrb[0].mxu0
        %v954 = vpop.f32.mrb[0].mxu0
        %v955 = vadd.f32 %v811, %v954
        %v956 = vpop.f32.mrb[0].mxu0
        %957 = vdwg.mxu0
        %v958 = vmax.f32 %v896, 0.0
        %v959 = vmax.f32 %v899, 0.0
        %v960 = vmax.f32 %v904, 0.0
        %v961 = vmax.f32 %v907, 0.0
        %v962 = vmax.f32 %v912, 0.0
        %v963 = vmax.f32 %v915, 0.0
        %v964 = vmax.f32 %v920, 0.0
        %v965 = vmax.f32 %v923, 0.0
        %v966 = vmax.f32 %v928, 0.0
        %v967 = vmax.f32 %v931, 0.0
        %v968 = vmax.f32 %v936, 0.0
        %v969 = vmax.f32 %v939, 0.0
        %v970 = vmax.f32 %v944, 0.0
        %v971 = vmax.f32 %v947, 0.0
        %v972 = vmax.f32 %v952, 0.0
        %v973 = vmax.f32 %v955, 0.0
        %v974 = vpack.c.bf16 %v959, %v958
        %v975 = vpack.c.bf16 %v961, %v960
        %v976 = vpack.c.bf16 %v963, %v962
        %v977 = vpack.c.bf16 %v965, %v964
        %v978 = vpack.c.bf16 %v967, %v966
        %v979 = vpack.c.bf16 %v969, %v968
        %v980 = vpack.c.bf16 %v971, %v970
        %v981 = vpack.c.bf16 %v973, %v972
        %v982 = vld [vmem:[#allocation9] sm:$0xf]
        %v983 = vld [vmem:[#allocation9 + $0x4] sm:$0xf]
        %v984 = vld [vmem:[#allocation9 + $0x8] sm:$0xf]
        %v985 = vld [vmem:[#allocation9 + $0xc] sm:$0xf]
        %v986 = vld [vmem:[#allocation9 + $0x10] sm:$0xf]
        %v987 = vld [vmem:[#allocation9 + $0x14] sm:$0xf]
        %v988 = vld [vmem:[#allocation9 + $0x18] sm:$0xf]
        %v989 = vld [vmem:[#allocation9 + $0x1c] sm:$0xf]
        %v990 = vld [vmem:[#allocation9 + $0x20] sm:$0xf]
        %v991 = vld [vmem:[#allocation9 + $0x24] sm:$0xf]
        %v992 = vld [vmem:[#allocation9 + $0x28] sm:$0xf]
        %v993 = vld [vmem:[#allocation9 + $0x2c] sm:$0xf]
        %v994 = vld [vmem:[#allocation9 + $0x30] sm:$0xf]
        %v995 = vld [vmem:[#allocation9 + $0x34] sm:$0xf]
        %v996 = vld [vmem:[#allocation9 + $0x38] sm:$0xf]
        %v997 = vld [vmem:[#allocation9 + $0x3c] sm:$0xf]
        %v998 = vld [vmem:[%s6] sm:$0x1]
        %v1000 = vlaneseq
        %v1001 = vshrl.u32 %v1000, 7
        %v1002 = vsub.s32 0, %v1001
        %v1003 = vrot.slane %v998, %v1002
        %v1021 = vunpack.c.l.b16 %v982
        %v1022 = vunpack.c.l.b16 %v983
        %v1023 = vunpack.c.l.b16 %v984
        %v1024 = vunpack.c.l.b16 %v985
        %v1025 = vunpack.c.l.b16 %v986
        %v1026 = vunpack.c.l.b16 %v987
        %v1027 = vunpack.c.l.b16 %v988
        %v1028 = vunpack.c.l.b16 %v989
        %v1029 = vunpack.c.l.b16 %v990
        %v1030 = vunpack.c.l.b16 %v991
        %v1031 = vunpack.c.l.b16 %v992
        %v1032 = vunpack.c.l.b16 %v993
        %v1033 = vunpack.c.l.b16 %v994
        %v1034 = vunpack.c.l.b16 %v995
        %v1035 = vunpack.c.l.b16 %v996
        %v1036 = vunpack.c.l.b16 %v997
        %v1037 = vpack.c.b16 %v1022, %v1021
        %v1038 = vpack.c.b16 %v1024, %v1023
        %v1039 = vpack.c.b16 %v1026, %v1025
        %v1040 = vpack.c.b16 %v1028, %v1027
        %v1041 = vpack.c.b16 %v1030, %v1029
        %v1042 = vpack.c.b16 %v1032, %v1031
        %v1043 = vpack.c.b16 %v1034, %v1033
        %v1044 = vpack.c.b16 %v1036, %v1035
        %1053 = vmatprep.subr.bf16.mxu0 0
        %1054 = vmatpush1.bf16.msra.mxu0 %v1037
        %1055 = vmatprep.subr.bf16.mxu0 0
        %1056 = vmatpush1.bf16.msra.mxu0 %v1038
        %1057 = vmatprep.subr.bf16.mxu0 0
        %1058 = vmatpush1.bf16.msra.mxu0 %v1039
        %1059 = vmatprep.subr.bf16.mxu0 0
        %1060 = vmatpush1.bf16.msra.mxu0 %v1040
        %1061 = vmatprep.subr.bf16.mxu0 0
        %1062 = vmatpush1.bf16.msra.mxu0 %v1041
        %1063 = vmatprep.subr.bf16.mxu0 0
        %1064 = vmatpush1.bf16.msra.mxu0 %v1042
        %1065 = vmatprep.subr.bf16.mxu0 0
        %1066 = vmatpush1.bf16.msra.mxu0 %v1043
        %1067 = vmatprep.subr.bf16.mxu0 0
        %1068 = vmatpush1.bf16.msra.mxu0 %v1044
        %1069 = vmatprep.subr.bf16.mxu0 0
        %1070 = vmatpush1.bf16.msra.mxu0 0
        %1071 = vmatprep.subr.bf16.mxu0 0
        %1072 = vmatpush1.bf16.msra.mxu0 0
        %1073 = vmatprep.subr.bf16.mxu0 0
        %1074 = vmatpush1.bf16.msra.mxu0 0
        %1075 = vmatprep.subr.bf16.mxu0 0
        %1076 = vmatpush1.bf16.msra.mxu0 0
        %1077 = vmatprep.subr.bf16.mxu0 0
        %1078 = vmatpush1.bf16.msra.mxu0 0
        %1079 = vmatprep.subr.bf16.mxu0 0
        %1080 = vmatpush1.bf16.msra.mxu0 0
        %1081 = vmatprep.subr.bf16.mxu0 0
        %1082 = vmatpush1.bf16.msra.mxu0 0
        %1083 = vmatprep.subr.bf16.mxu0 0
        %1084 = vmatpush1.bf16.msra.mxu0 0
        %1085 = vmatprep.mubr.bf16.mxu0 0
        %1086 = vmatmul.mubr.bf16.gmra.mrb[0].mxu0 %v974
        %v1087 = vpop.f32.mrb[0].mxu0
        %v1088 = vadd.f32 %v1003, %v1087
        %v1089 = vpop.f32.mrb[0].mxu0
        %v1090 = vpop.f32.mrb[0].mxu0
        %v1091 = vadd.f32 %v1003, %v1090
        %v1092 = vpop.f32.mrb[0].mxu0
        %1093 = vmatprep.mubr.bf16.mxu0 0
        %1094 = vmatmul.mubr.bf16.gmra.mrb[0].mxu0 %v975
        %v1095 = vpop.f32.mrb[0].mxu0
        %v1096 = vadd.f32 %v1003, %v1095
        %v1097 = vpop.f32.mrb[0].mxu0
        %v1098 = vpop.f32.mrb[0].mxu0
        %v1099 = vadd.f32 %v1003, %v1098
        %v1100 = vpop.f32.mrb[0].mxu0
        %1101 = vmatprep.mubr.bf16.mxu0 0
        %1102 = vmatmul.mubr.bf16.gmra.mrb[0].mxu0 %v976
        %v1103 = vpop.f32.mrb[0].mxu0
        %v1104 = vadd.f32 %v1003, %v1103
        %v1105 = vpop.f32.mrb[0].mxu0
        %v1106 = vpop.f32.mrb[0].mxu0
        %v1107 = vadd.f32 %v1003, %v1106
        %v1108 = vpop.f32.mrb[0].mxu0
        %1109 = vmatprep.mubr.bf16.mxu0 0
        %1110 = vmatmul.mubr.bf16.gmra.mrb[0].mxu0 %v977
        %v1111 = vpop.f32.mrb[0].mxu0
        %v1112 = vadd.f32 %v1003, %v1111
        %v1113 = vpop.f32.mrb[0].mxu0
        %v1114 = vpop.f32.mrb[0].mxu0
        %v1115 = vadd.f32 %v1003, %v1114
        %v1116 = vpop.f32.mrb[0].mxu0
        %1117 = vmatprep.mubr.bf16.mxu0 0
        %1118 = vmatmul.mubr.bf16.gmra.mrb[0].mxu0 %v978
        %v1119 = vpop.f32.mrb[0].mxu0
        %v1120 = vadd.f32 %v1003, %v1119
        %v1121 = vpop.f32.mrb[0].mxu0
        %v1122 = vpop.f32.mrb[0].mxu0
        %v1123 = vadd.f32 %v1003, %v1122
        %v1124 = vpop.f32.mrb[0].mxu0
        %1125 = vmatprep.mubr.bf16.mxu0 0
        %1126 = vmatmul.mubr.bf16.gmra.mrb[0].mxu0 %v979
        %v1127 = vpop.f32.mrb[0].mxu0
        %v1128 = vadd.f32 %v1003, %v1127
        %v1129 = vpop.f32.mrb[0].mxu0
        %v1130 = vpop.f32.mrb[0].mxu0
        %v1131 = vadd.f32 %v1003, %v1130
        %v1132 = vpop.f32.mrb[0].mxu0
        %1133 = vmatprep.mubr.bf16.mxu0 0
        %1134 = vmatmul.mubr.bf16.gmra.mrb[0].mxu0 %v980
        %v1135 = vpop.f32.mrb[0].mxu0
        %v1136 = vadd.f32 %v1003, %v1135
        %v1137 = vpop.f32.mrb[0].mxu0
        %v1138 = vpop.f32.mrb[0].mxu0
        %v1139 = vadd.f32 %v1003, %v1138
        %v1140 = vpop.f32.mrb[0].mxu0
        %1141 = vmatprep.mubr.bf16.mxu0 0
        %1142 = vmatmul.mubr.bf16.gmra.mrb[0].mxu0 %v981
        %v1143 = vpop.f32.mrb[0].mxu0
        %v1144 = vadd.f32 %v1003, %v1143
        %v1145 = vpop.f32.mrb[0].mxu0
        %v1146 = vpop.f32.mrb[0].mxu0
        %v1147 = vadd.f32 %v1003, %v1146
        %v1148 = vpop.f32.mrb[0].mxu0
        %1149 = vdwg.mxu0
        %v1150 = vmax.f32 %v1088, 0.0
        %v1151 = vmax.f32 %v1091, 0.0
        %v1152 = vmax.f32 %v1096, 0.0
        %v1153 = vmax.f32 %v1099, 0.0
        %v1154 = vmax.f32 %v1104, 0.0
        %v1155 = vmax.f32 %v1107, 0.0
        %v1156 = vmax.f32 %v1112, 0.0
        %v1157 = vmax.f32 %v1115, 0.0
        %v1158 = vmax.f32 %v1120, 0.0
        %v1159 = vmax.f32 %v1123, 0.0
        %v1160 = vmax.f32 %v1128, 0.0
        %v1161 = vmax.f32 %v1131, 0.0
        %v1162 = vmax.f32 %v1136, 0.0
        %v1163 = vmax.f32 %v1139, 0.0
        %v1164 = vmax.f32 %v1144, 0.0
        %v1165 = vmax.f32 %v1147, 0.0
        %v1166 = vpack.c.bf16 %v1151, %v1150
        %v1167 = vpack.c.bf16 %v1153, %v1152
        %v1168 = vpack.c.bf16 %v1155, %v1154
        %v1169 = vpack.c.bf16 %v1157, %v1156
        %v1170 = vpack.c.bf16 %v1159, %v1158
        %v1171 = vpack.c.bf16 %v1161, %v1160
        %v1172 = vpack.c.bf16 %v1163, %v1162
        %v1173 = vpack.c.bf16 %v1165, %v1164
        %v1174 = vld [vmem:[#allocation11] sm:$0xf]
        %v1175 = vld [vmem:[#allocation11 + $0x4] sm:$0xf]
        %v1176 = vld [vmem:[#allocation11 + $0x8] sm:$0xf]
        %v1177 = vld [vmem:[#allocation11 + $0xc] sm:$0xf]
        %v1178 = vld [vmem:[#allocation11 + $0x10] sm:$0xf]
        %v1179 = vld [vmem:[#allocation11 + $0x14] sm:$0xf]
        %v1180 = vld [vmem:[#allocation11 + $0x18] sm:$0xf]
        %v1181 = vld [vmem:[#allocation11 + $0x1c] sm:$0xf]
        %v1182 = vld [vmem:[#allocation11 + $0x20] sm:$0xf]
        %v1183 = vld [vmem:[#allocation11 + $0x24] sm:$0xf]
        %v1184 = vld [vmem:[#allocation11 + $0x28] sm:$0xf]
        %v1185 = vld [vmem:[#allocation11 + $0x2c] sm:$0xf]
        %v1186 = vld [vmem:[#allocation11 + $0x30] sm:$0xf]
        %v1187 = vld [vmem:[#allocation11 + $0x34] sm:$0xf]
        %v1188 = vld [vmem:[#allocation11 + $0x38] sm:$0xf]
        %v1189 = vld [vmem:[#allocation11 + $0x3c] sm:$0xf]
        %v1190 = vld [vmem:[%s8] sm:$0x1]
        %v1192 = vlaneseq
        %v1193 = vshrl.u32 %v1192, 7
        %v1194 = vsub.s32 0, %v1193
        %v1195 = vrot.slane %v1190, %v1194
        %v1213 = vunpack.c.l.b16 %v1174
        %v1214 = vunpack.c.l.b16 %v1175
        %v1215 = vunpack.c.l.b16 %v1176
        %v1216 = vunpack.c.l.b16 %v1177
        %v1217 = vunpack.c.l.b16 %v1178
        %v1218 = vunpack.c.l.b16 %v1179
        %v1219 = vunpack.c.l.b16 %v1180
        %v1220 = vunpack.c.l.b16 %v1181
        %v1221 = vunpack.c.l.b16 %v1182
        %v1222 = vunpack.c.l.b16 %v1183
        %v1223 = vunpack.c.l.b16 %v1184
        %v1224 = vunpack.c.l.b16 %v1185
        %v1225 = vunpack.c.l.b16 %v1186
        %v1226 = vunpack.c.l.b16 %v1187
        %v1227 = vunpack.c.l.b16 %v1188
        %v1228 = vunpack.c.l.b16 %v1189
        %v1229 = vpack.c.b16 %v1214, %v1213
        %v1230 = vpack.c.b16 %v1216, %v1215
        %v1231 = vpack.c.b16 %v1218, %v1217
        %v1232 = vpack.c.b16 %v1220, %v1219
        %v1233 = vpack.c.b16 %v1222, %v1221
        %v1234 = vpack.c.b16 %v1224, %v1223
        %v1235 = vpack.c.b16 %v1226, %v1225
        %v1236 = vpack.c.b16 %v1228, %v1227
        %1245 = vmatprep.subr.bf16.mxu0 0
        %1246 = vmatpush1.bf16.msra.mxu0 %v1229
        %1247 = vmatprep.subr.bf16.mxu0 0
        %1248 = vmatpush1.bf16.msra.mxu0 %v1230
        %1249 = vmatprep.subr.bf16.mxu0 0
        %1250 = vmatpush1.bf16.msra.mxu0 %v1231
        %1251 = vmatprep.subr.bf16.mxu0 0
        %1252 = vmatpush1.bf16.msra.mxu0 %v1232
        %1253 = vmatprep.subr.bf16.mxu0 0
        %1254 = vmatpush1.bf16.msra.mxu0 %v1233
        %1255 = vmatprep.subr.bf16.mxu0 0
        %1256 = vmatpush1.bf16.msra.mxu0 %v1234
        %1257 = vmatprep.subr.bf16.mxu0 0
        %1258 = vmatpush1.bf16.msra.mxu0 %v1235
        %1259 = vmatprep.subr.bf16.mxu0 0
        %1260 = vmatpush1.bf16.msra.mxu0 %v1236
        %1261 = vmatprep.subr.bf16.mxu0 0
        %1262 = vmatpush1.bf16.msra.mxu0 0
        %1263 = vmatprep.subr.bf16.mxu0 0
        %1264 = vmatpush1.bf16.msra.mxu0 0
        %1265 = vmatprep.subr.bf16.mxu0 0
        %1266 = vmatpush1.bf16.msra.mxu0 0
        %1267 = vmatprep.subr.bf16.mxu0 0
        %1268 = vmatpush1.bf16.msra.mxu0 0
        %1269 = vmatprep.subr.bf16.mxu0 0
        %1270 = vmatpush1.bf16.msra.mxu0 0
        %1271 = vmatprep.subr.bf16.mxu0 0
        %1272 = vmatpush1.bf16.msra.mxu0 0
        %1273 = vmatprep.subr.bf16.mxu0 0
        %1274 = vmatpush1.bf16.msra.mxu0 0
        %1275 = vmatprep.subr.bf16.mxu0 0
        %1276 = vmatpush1.bf16.msra.mxu0 0
        %1277 = vmatprep.mubr.bf16.mxu0 0
        %1278 = vmatmul.mubr.bf16.gmra.mrb[0].mxu0 %v1166
        %v1279 = vpop.f32.mrb[0].mxu0
        %v1280 = vadd.f32 %v1195, %v1279
        %v1281 = vpop.f32.mrb[0].mxu0
        %v1282 = vpop.f32.mrb[0].mxu0
        %v1283 = vadd.f32 %v1195, %v1282
        %v1284 = vpop.f32.mrb[0].mxu0
        %1285 = vmatprep.mubr.bf16.mxu0 0
        %1286 = vmatmul.mubr.bf16.gmra.mrb[0].mxu0 %v1167
        %v1287 = vpop.f32.mrb[0].mxu0
        %v1288 = vadd.f32 %v1195, %v1287
        %v1289 = vpop.f32.mrb[0].mxu0
        %v1290 = vpop.f32.mrb[0].mxu0
        %v1291 = vadd.f32 %v1195, %v1290
        %v1292 = vpop.f32.mrb[0].mxu0
        %1293 = vmatprep.mubr.bf16.mxu0 0
        %1294 = vmatmul.mubr.bf16.gmra.mrb[0].mxu0 %v1168
        %v1295 = vpop.f32.mrb[0].mxu0
        %v1296 = vadd.f32 %v1195, %v1295
        %v1297 = vpop.f32.mrb[0].mxu0
        %v1298 = vpop.f32.mrb[0].mxu0
        %v1299 = vadd.f32 %v1195, %v1298
        %v1300 = vpop.f32.mrb[0].mxu0
        %1301 = vmatprep.mubr.bf16.mxu0 0
        %1302 = vmatmul.mubr.bf16.gmra.mrb[0].mxu0 %v1169
        %v1303 = vpop.f32.mrb[0].mxu0
        %v1304 = vadd.f32 %v1195, %v1303
        %v1305 = vpop.f32.mrb[0].mxu0
        %v1306 = vpop.f32.mrb[0].mxu0
        %v1307 = vadd.f32 %v1195, %v1306
        %v1308 = vpop.f32.mrb[0].mxu0
        %1309 = vmatprep.mubr.bf16.mxu0 0
        %1310 = vmatmul.mubr.bf16.gmra.mrb[0].mxu0 %v1170
        %v1311 = vpop.f32.mrb[0].mxu0
        %v1312 = vadd.f32 %v1195, %v1311
        %v1313 = vpop.f32.mrb[0].mxu0
        %v1314 = vpop.f32.mrb[0].mxu0
        %v1315 = vadd.f32 %v1195, %v1314
        %v1316 = vpop.f32.mrb[0].mxu0
        %1317 = vmatprep.mubr.bf16.mxu0 0
        %1318 = vmatmul.mubr.bf16.gmra.mrb[0].mxu0 %v1171
        %v1319 = vpop.f32.mrb[0].mxu0
        %v1320 = vadd.f32 %v1195, %v1319
        %v1321 = vpop.f32.mrb[0].mxu0
        %v1322 = vpop.f32.mrb[0].mxu0
        %v1323 = vadd.f32 %v1195, %v1322
        %v1324 = vpop.f32.mrb[0].mxu0
        %1325 = vmatprep.mubr.bf16.mxu0 0
        %1326 = vmatmul.mubr.bf16.gmra.mrb[0].mxu0 %v1172
        %v1327 = vpop.f32.mrb[0].mxu0
        %v1328 = vadd.f32 %v1195, %v1327
        %v1329 = vpop.f32.mrb[0].mxu0
        %v1330 = vpop.f32.mrb[0].mxu0
        %v1331 = vadd.f32 %v1195, %v1330
        %v1332 = vpop.f32.mrb[0].mxu0
        %1333 = vmatprep.mubr.bf16.mxu0 0
        %1334 = vmatmul.mubr.bf16.gmra.mrb[0].mxu0 %v1173
        %v1335 = vpop.f32.mrb[0].mxu0
        %v1336 = vadd.f32 %v1195, %v1335
        %v1337 = vpop.f32.mrb[0].mxu0
        %v1338 = vpop.f32.mrb[0].mxu0
        %v1339 = vadd.f32 %v1195, %v1338
        %v1340 = vpop.f32.mrb[0].mxu0
        %1341 = vdwg.mxu0
        %1342 = vst [vmem:[%s570] sm:$0xff] %v1280
        %1343 = vst [vmem:[%s570 + $0x8] sm:$0xff] %v1283
        %1344 = vst [vmem:[%s570 + $0x10] sm:$0xff] %v1288
        %1345 = vst [vmem:[%s570 + $0x18] sm:$0xff] %v1291
        %1346 = vst [vmem:[%s570 + $0x20] sm:$0xff] %v1296
        %1347 = vst [vmem:[%s570 + $0x28] sm:$0xff] %v1299
        %1348 = vst [vmem:[%s570 + $0x30] sm:$0xff] %v1304
        %1349 = vst [vmem:[%s570 + $0x38] sm:$0xff] %v1307
        %1350 = vst [vmem:[%s570 + $0x40] sm:$0xff] %v1312
        %1351 = vst [vmem:[%s570 + $0x48] sm:$0xff] %v1315
        %1352 = vst [vmem:[%s570 + $0x50] sm:$0xff] %v1320
        %1353 = vst [vmem:[%s570 + $0x58] sm:$0xff] %v1323
        %1354 = vst [vmem:[%s570 + $0x60] sm:$0xff] %v1328
        %1355 = vst [vmem:[%s570 + $0x68] sm:$0xff] %v1331
        %1356 = vst [vmem:[%s570 + $0x70] sm:$0xff] %v1336
        %1357 = vst [vmem:[%s570 + $0x78] sm:$0xff] %v1339
        %s1358 = sand.u32 %s362, 1
        %s1359 = scalar_lea.sflag [#allocation5], %s1358
        %s1360 = sand.u32 %s362, 1
        %s1361 = smul.addr %s1360, 128
        %s1362 = scalar_lea.vmem [#allocation12], %s1361
        // Predicated region
        $region101: #{tpu_custom_call.1} parent=79 // pred_check
          %p1363 = pneg %p372
        $region102: #{tpu_custom_call.1} parent=79 // pred_check_branch
          %1365 = sbr.rel (%p1363) target = $region104
        $region103: #{tpu_custom_call.1} parent=79 // pred_region
          %s1366 = smul.u32 16, %s34
          %s1368 = ssub.s32 2048, 2048
          %1369 = vsyncadd %s1359, %s1368
          %s1370 = smul.addr %s1366, 128
          %s1371 = scalar_lea.hbm %s15, %s1370
          %s1372 = sshll.u32 %s1362, 4
          %s1373 = int_to_ptr.vmem [resolvable:$true] %s1372
          %1378 = dma.vmem_to_hbm [thread:$0]  %s1373, 2048, %s1371, %s1359, 128, 128, 8
        $region104: #{tpu_custom_call.1} parent=79 // pred_fallthru
          _
      $region80: #{tpu_custom_call.1} parent=5 // pred_fallthru
        _
      %p1379 = scmp.le.s32.totalorder 2, %s29
      // Predicated region
      $region105: #{tpu_custom_call.1} parent=5 // pred_check
        %p1380 = pneg %p1379
      $region106: #{tpu_custom_call.1} parent=5 // pred_check_branch
        %1382 = sbr.rel (%p1380) target = $region108
      $region107: #{tpu_custom_call.1} parent=5 // pred_region
        %s1383 = ssub.s32 %s29, 2
        // Predicated region
        $region109: #{tpu_custom_call.1} parent=107 // pred_check
          %p1384 = pneg %p378
        $region110: #{tpu_custom_call.1} parent=107 // pred_check_branch
          %1386 = sbr.rel (%p1384) target = $region112
        $region111: #{tpu_custom_call.1} parent=107 // pred_region
          %s1387 = sand.u32 %s363, 1
          %s1388 = scalar_lea.sflag [#allocation5], %s1387
          %s1389 = sand.u32 %s363, 1
          %s1390 = smul.addr %s1389, 128
          %s1391 = scalar_lea.vmem [#allocation12], %s1390
          %1392 = dma.done %s1388, 2048
        $region112: #{tpu_custom_call.1} parent=107 // pred_fallthru
          _
      $region108: #{tpu_custom_call.1} parent=5 // pred_fallthru
        _
    $region6: #{tpu_custom_call.1} parent=1 // loop_footer
      %s33 = sadd.s32 1, %s29
    $region7: #{tpu_custom_call.1} parent=1 // loop_footer_branch
      %28 = sbr.rel target = $region3
    $region8: #{tpu_custom_call.1} parent=1 // loop_exit
      _
    %1393 = vsyncpa [#allocation4], 1
    %s1394 = scalar_lea.sflag [#allocation4], 1
    %1395 = vsyncpa %s1394, 1
    %1396 = vsyncpa [#allocation7], 1
    %1397 = vsyncpa [#allocation10], 1
    %1398 = vsyncpa [#allocation5], 1
    %s1399 = scalar_lea.sflag [#allocation5], 1
    %1400 = vsyncpa %s1399, 1

</llo_original>
